<compile_context>
chip_gen: v6e
topology: v6e:2x2x1
jax: 0.10.0
libtpu: 0.0.40
codegen_flags: <defaults>
</compile_context>

<pallas_src>
import functools

import jax
import jax.numpy as jnp
import numpy as np
from jax.experimental import pallas as pl
from jax.experimental.pallas import tpu as pltpu

HEAD_N = 256  # fused head weight lane width (intervals @ 0:5, confidence @ 128:133)


# ----------------------------------------------------------------------------
# Pallas kernel: full forward pass (bi-GRU recurrence + fused linear heads).
# ----------------------------------------------------------------------------
def _temporal_predictor_kernel(
    x_ref,            # [T*B, I]   bf16, time-major flattened input
    wih_f_ref,        # [I, 3H]    bf16  forward input weights (W_ih^T)
    whh_f_ref,        # [H, 3H]    bf16  forward recurrent weights (W_hh^T)
    bgi_f_ref,        # [1, 3H]    f32   folded bias: [bir+bhr, biz+bhz, bin]
    bhn_f_ref,        # [1, H]     f32   b_hn (stays inside r * (...))
    wih_b_ref,        # [I, 3H]    bf16  backward input weights
    bgi_b_ref,        # [1, 3H]    f32   folded backward bias
    bhn_b_ref,        # [1, H]     f32
    whead_f_ref,      # [H, 256]   bf16  fused head weights, forward half
    whead_b_ref,      # [H, 256]   bf16  fused head weights, backward half
    bhead_ref,        # [1, 256]   f32   fused head bias
    intervals_ref,    # [B, 5]     f32   out
    confidence_ref,   # [B, 5]     f32   out
    *,
    seq_len,
    batch,
):
    T, B = seq_len, batch
    H = whh_f_ref.shape[0]
    f32 = jnp.float32
    bf16 = jnp.bfloat16

    # ---- Input projection for ALL timesteps in one wide MXU matmul.  The
    # forward-direction gi never depends on h, so it lives off the serial
    # recurrence path; non-recurrent biases are pre-folded into bgi_f.
    gi_all = jnp.dot(x_ref[...], wih_f_ref[...],
                     preferred_element_type=f32) + bgi_f_ref[...]       # [T*B, 3H]

    # ---- Backward direction.  output[:, -1, H:] is the backward GRU state
    # after a SINGLE step on x[:, T-1] starting from h = 0 (NOT the backward
    # final state), so h @ W_hh_b == 0 and only the input projection + gate
    # math remain.  Placed before the forward loop so its MXU work interleaves
    # with gi_all.
    x_last = x_ref[pl.ds((T - 1) * B, B), :]                            # [B, I]
    gi_b = jnp.dot(x_last, wih_b_ref[...],
                   preferred_element_type=f32) + bgi_b_ref[...]         # [B, 3H]
    r_b = jax.nn.sigmoid(gi_b[:, 0 * H:1 * H])
    z_b = jax.nn.sigmoid(gi_b[:, 1 * H:2 * H])
    n_b = jnp.tanh(gi_b[:, 2 * H:3 * H] + r_b * bhn_b_ref[...])
    h_bwd = (1.0 - z_b) * n_b                                           # [B, H]

    # ---- Forward recurrence (fully unrolled, T is static).  Only the
    # [B, H] @ [H, 3H] recurrent matmul + gate math remain per step.
    whh_f = whh_f_ref[...]                                              # bf16
    bhn_f = jnp.broadcast_to(bhn_f_ref[...], (B, H))                    # hoisted broadcast
    h = jnp.zeros((B, H), f32)
    for t in range(T):
        gi = gi_all[t * B:(t + 1) * B, :]                               # static slice
        gh = jnp.dot(h.astype(bf16), whh_f, preferred_element_type=f32)
        r = jax.nn.sigmoid(gi[:, 0 * H:1 * H] + gh[:, 0 * H:1 * H])
        z = jax.nn.sigmoid(gi[:, 1 * H:2 * H] + gh[:, 1 * H:2 * H])
        n = jnp.tanh(gi[:, 2 * H:3 * H] + r * (gh[:, 2 * H:3 * H] + bhn_f))
        h = (1.0 - z) * n + z * h
    h_fwd = h

    # ---- Fused heads: no [B, 2H] concatenate; one stacked weight, split by
    # direction.  Interval logits in lanes 0:5, confidence logits in 128:133.
    head = (jnp.dot(h_fwd.astype(bf16), whead_f_ref[...], preferred_element_type=f32)
            + jnp.dot(h_bwd.astype(bf16), whead_b_ref[...], preferred_element_type=f32)
            + bhead_ref[...])                                           # [B, 256]
    intervals_ref[...] = jnp.abs(head[:, 0:5])
    confidence_ref[...] = jax.nn.sigmoid(head[:, 128:128 + 5])


# ----------------------------------------------------------------------------
# Wrapper
# ----------------------------------------------------------------------------
def temporal_predictor_forward(x, params):
    """x: [B, T, I] (PyTorch batch_first).  Returns (intervals, confidence): [B, 5]."""
    B, T, I = x.shape
    H = params["whh_f"].shape[0]
    f32, bf16 = jnp.float32, jnp.bfloat16

    # Time-major, flattened, bf16 MXU operand.
    x_flat = jnp.transpose(x, (1, 0, 2)).reshape(T * B, I).astype(bf16)

    def fold_gi_bias(bih, bhh):
        # r and z gates: b_ih + b_hh can be pre-summed; the n-gate b_hn must
        # stay separate because it sits inside r * (W_hn h + b_hn).
        return jnp.concatenate(
            [bih[:, :2 * H] + bhh[:, :2 * H], bih[:, 2 * H:]], axis=1).astype(f32)

    bgi_f = fold_gi_bias(params["bih_f"], params["bhh_f"])
    bhn_f = params["bhh_f"][:, 2 * H:].astype(f32)
    bgi_b = fold_gi_bias(params["bih_b"], params["bhh_b"])
    bhn_b = params["bhh_b"][:, 2 * H:].astype(f32)

    # Fused head weights: [2H, 256] with interval head in lanes 0:5 and
    # confidence head in lanes 128:133, then split by GRU direction.
    w_head = jnp.zeros((2 * H, HEAD_N), f32)
    w_head = w_head.at[:, 0:5].set(params["wi"])
    w_head = w_head.at[:, 128:133].set(params["wc"])
    b_head = jnp.zeros((1, HEAD_N), f32)
    b_head = b_head.at[:, 0:5].set(params["bi"])
    b_head = b_head.at[:, 128:133].set(params["bc"])
    whead_f = w_head[:H].astype(bf16)
    whead_b = w_head[H:].astype(bf16)

    args = (
        x_flat,
        params["wih_f"].astype(bf16), params["whh_f"].astype(bf16), bgi_f, bhn_f,
        params["wih_b"].astype(bf16), bgi_b, bhn_b,
        whead_f, whead_b, b_head,
    )

    vmem_spec = pl.BlockSpec(memory_space=pltpu.MemorySpace.VMEM)
    kernel = functools.partial(_temporal_predictor_kernel, seq_len=T, batch=B)

    # Grid-less: the whole working set (< 1 MiB) stays resident in VMEM on all
    # generations.  For batched throughput on v7x, add a grid over batch tiles
    # with dimension_semantics=("parallel",) to engage the second TensorCore.
    intervals, confidence = pl.pallas_call(
        kernel,
        out_shape=(
            jax.ShapeDtypeStruct((B, 5), f32),
            jax.ShapeDtypeStruct((B, 5), f32),
        ),
        in_specs=[vmem_spec] * len(args),
        out_specs=(vmem_spec, vmem_spec),
    )(*args)
    return intervals, confidence


# ----------------------------------------------------------------------------
# Deterministic parameter init (shapes match nn.GRU(64, 128, bidirectional)
# plus two Linear(256, 5) heads).  Weights are stored pre-transposed for the
# kernel's [B, K] @ [K, N] convention (PyTorch gate order r, z, n).
# ----------------------------------------------------------------------------
def init_params(key, input_size, hidden_size):
    H, I = hidden_size, input_size
    keys = jax.random.split(key, 12)
    s_gru = 1.0 / np.sqrt(H)
    s_lin = 1.0 / np.sqrt(2 * H)

    def u(k, shape, scale):
        return jax.random.uniform(k, shape, jnp.float32, -scale, scale)

    return {
        # forward direction (W^T layouts)
        "wih_f": u(keys[0], (I, 3 * H), s_gru),
        "whh_f": u(keys[1], (H, 3 * H), s_gru),
        "bih_f": u(keys[2], (1, 3 * H), s_gru),
        "bhh_f": u(keys[3], (1, 3 * H), s_gru),
        # reverse direction
        "wih_b": u(keys[4], (I, 3 * H), s_gru),
        "whh_b": u(keys[5], (H, 3 * H), s_gru),
        "bih_b": u(keys[6], (1, 3 * H), s_gru),
        "bhh_b": u(keys[7], (1, 3 * H), s_gru),
        # heads
        "wi": u(keys[8], (2 * H, 5), s_lin),
        "bi": u(keys[9], (1, 5), s_lin),
        "wc": u(keys[10], (2 * H, 5), s_lin),
        "bc": u(keys[11], (1, 5), s_lin),
    }


# ----------------------------------------------------------------------------
# Pure-JAX reference (FULL bidirectional GRU, PyTorch parameterization).
# MXU operands are cast to bfloat16 exactly like the kernel so the comparison
# stays tight while still exercising the original (unfolded, concatenated)
# formulation — including the full backward recurrence, which validates the
# kernel's single-backward-step treatment of output[:, -1, H:].
# ----------------------------------------------------------------------------
def reference_forward(x, params):
    B, T, I = x.shape
    H = params["whh_f"].shape[0]
    bf16, f32 = jnp.bfloat16, jnp.float32

    def step(h, x_t, wih, whh, bih, bhh):
        gi = jnp.dot(x_t.astype(bf16), wih.astype(bf16),
                     preferred_element_type=f32) + bih
        gh = jnp.dot(h.astype(bf16), whh.astype(bf16),
                     preferred_element_type=f32) + bhh
        r = jax.nn.sigmoid(gi[:, :H] + gh[:, :H])
        z = jax.nn.sigmoid(gi[:, H:2 * H] + gh[:, H:2 * H])
        n = jnp.tanh(gi[:, 2 * H:] + r * gh[:, 2 * H:])
        return (1.0 - z) * n + z * h

    h = jnp.zeros((B, H), f32)
    for t in range(T):
        h = step(h, x[:, t, :], params["wih_f"], params["whh_f"],
                 params["bih_f"], params["bhh_f"])
    h_fwd_last = h

    h = jnp.zeros((B, H), f32)
    bwd_states = [None] * T
    for t in range(T - 1, -1, -1):
        h = step(h, x[:, t, :], params["wih_b"], params["whh_b"],
                 params["bih_b"], params["bhh_b"])
        bwd_states[t] = h
    h_bwd_last = bwd_states[T - 1]

    last = jnp.concatenate([h_fwd_last, h_bwd_last], axis=-1)
    intervals = jnp.abs(
        jnp.dot(last.astype(bf16), params["wi"].astype(bf16),
                preferred_element_type=f32) + params["bi"])
    confidence = jax.nn.sigmoid(
        jnp.dot(last.astype(bf16), params["wc"].astype(bf16),
                preferred_element_type=f32) + params["bc"])
    return intervals, confidence


if __name__ == "__main__":
    # Module defaults: input_size=64, hidden_size=128.  B=8 keeps the
    # per-step [B, ...] tiles sublane-aligned.
    B, T, I, H = 8, 8, 64, 128

    key = jax.random.PRNGKey(0)
    k_param, k_x = jax.random.split(key)
    params = init_params(k_param, I, H)
    x = jax.random.normal(k_x, (B, T, I), jnp.float32)

    intervals, confidence = jax.block_until_ready(
        temporal_predictor_forward(x, params))

    ref_int, ref_conf = reference_forward(x, params)
    assert intervals.shape == (B, 5) and confidence.shape == (B, 5)
    # bf16 MXU operands (kernel & reference both) -> tolerance per review.
    np.testing.assert_allclose(np.asarray(intervals), np.asarray(ref_int),
                               rtol=1e-2, atol=1e-2)
    np.testing.assert_allclose(np.asarray(confidence), np.asarray(ref_conf),
                               rtol=1e-2, atol=1e-2)

    print("KERNEL_OK")
</pallas_src>

<mosaic_0001>
module attributes {stable_mosaic.version = 11 : i64} {
  func.func @_temporal_predictor_kernel(%arg0: memref<64x64xbf16, #tpu.memory_space<vmem>>, %arg1: memref<64x384xbf16, #tpu.memory_space<vmem>>, %arg2: memref<128x384xbf16, #tpu.memory_space<vmem>>, %arg3: memref<1x384xf32, #tpu.memory_space<vmem>>, %arg4: memref<1x128xf32, #tpu.memory_space<vmem>>, %arg5: memref<64x384xbf16, #tpu.memory_space<vmem>>, %arg6: memref<1x384xf32, #tpu.memory_space<vmem>>, %arg7: memref<1x128xf32, #tpu.memory_space<vmem>>, %arg8: memref<128x256xbf16, #tpu.memory_space<vmem>>, %arg9: memref<128x256xbf16, #tpu.memory_space<vmem>>, %arg10: memref<1x256xf32, #tpu.memory_space<vmem>>, %arg11: memref<8x5xf32, #tpu.memory_space<vmem>>, %arg12: memref<8x5xf32, #tpu.memory_space<vmem>>) attributes {dimension_semantics = [], scalar_prefetch = 0 : i64, scratch_operands = 0 : i64, tpu.core_type = #tpu.core_type<tc>} {
    %c0 = arith.constant 0 : index
    %c0_0 = arith.constant 0 : index
    %0 = vector.load %arg0[%c0, %c0_0] : memref<64x64xbf16, #tpu.memory_space<vmem>>, vector<64x64xbf16>
    %c0_1 = arith.constant 0 : index
    %c0_2 = arith.constant 0 : index
    %1 = vector.load %arg1[%c0_1, %c0_2] : memref<64x384xbf16, #tpu.memory_space<vmem>>, vector<64x384xbf16>
    %cst = arith.constant dense<0.000000e+00> : vector<64x384xf32>
    %2 = tpu.matmul %0, %1, %cst {dimension_numbers = #tpu.dot_dimension_numbers<[1], [0], [0], [1], [0, 0, 1, 1], [], []>} : vector<64x64xbf16>, vector<64x384xbf16>, vector<64x384xf32> -> vector<64x384xf32>
    %c0_3 = arith.constant 0 : index
    %c0_4 = arith.constant 0 : index
    %3 = vector.load %arg3[%c0_3, %c0_4] : memref<1x384xf32, #tpu.memory_space<vmem>>, vector<1x384xf32>
    %4 = vector.broadcast %3 : vector<1x384xf32> to vector<64x384xf32>
    %5 = arith.addf %2, %4 : vector<64x384xf32>
    %c56 = arith.constant 56 : index
    %c0_5 = arith.constant 0 : index
    %6 = vector.load %arg0[%c56, %c0_5] : memref<64x64xbf16, #tpu.memory_space<vmem>>, vector<8x64xbf16>
    %c0_6 = arith.constant 0 : index
    %c0_7 = arith.constant 0 : index
    %7 = vector.load %arg5[%c0_6, %c0_7] : memref<64x384xbf16, #tpu.memory_space<vmem>>, vector<64x384xbf16>
    %cst_8 = arith.constant dense<0.000000e+00> : vector<8x384xf32>
    %8 = tpu.matmul %6, %7, %cst_8 {dimension_numbers = #tpu.dot_dimension_numbers<[1], [0], [0], [1], [0, 0, 1, 1], [], []>} : vector<8x64xbf16>, vector<64x384xbf16>, vector<8x384xf32> -> vector<8x384xf32>
    %c0_9 = arith.constant 0 : index
    %c0_10 = arith.constant 0 : index
    %9 = vector.load %arg6[%c0_9, %c0_10] : memref<1x384xf32, #tpu.memory_space<vmem>>, vector<1x384xf32>
    %10 = vector.broadcast %9 : vector<1x384xf32> to vector<8x384xf32>
    %11 = arith.addf %8, %10 : vector<8x384xf32>
    %12 = vector.extract_strided_slice %11 {offsets = [0, 0], sizes = [8, 128], strides = [1, 1]} : vector<8x384xf32> to vector<8x128xf32>
    %13 = arith.negf %12 : vector<8x128xf32>
    %14 = math.exp %13 : vector<8x128xf32>
    %cst_11 = arith.constant 1.000000e+00 : f32
    %15 = vector.broadcast %cst_11 : f32 to vector<8x128xf32>
    %16 = arith.addf %15, %14 : vector<8x128xf32>
    %17 = arith.divf %15, %16 : vector<8x128xf32>
    %18 = vector.extract_strided_slice %11 {offsets = [0, 128], sizes = [8, 128], strides = [1, 1]} : vector<8x384xf32> to vector<8x128xf32>
    %19 = arith.negf %18 : vector<8x128xf32>
    %20 = math.exp %19 : vector<8x128xf32>
    %cst_12 = arith.constant 1.000000e+00 : f32
    %21 = vector.broadcast %cst_12 : f32 to vector<8x128xf32>
    %22 = arith.addf %21, %20 : vector<8x128xf32>
    %23 = arith.divf %21, %22 : vector<8x128xf32>
    %24 = vector.extract_strided_slice %11 {offsets = [0, 256], sizes = [8, 128], strides = [1, 1]} : vector<8x384xf32> to vector<8x128xf32>
    %c0_13 = arith.constant 0 : index
    %c0_14 = arith.constant 0 : index
    %25 = vector.load %arg7[%c0_13, %c0_14] : memref<1x128xf32, #tpu.memory_space<vmem>>, vector<1x128xf32>
    %26 = vector.broadcast %25 : vector<1x128xf32> to vector<8x128xf32>
    %27 = arith.mulf %17, %26 : vector<8x128xf32>
    %28 = arith.addf %24, %27 : vector<8x128xf32>
    %29 = math.tanh %28 : vector<8x128xf32>
    %cst_15 = arith.constant 1.000000e+00 : f32
    %30 = vector.broadcast %cst_15 : f32 to vector<8x128xf32>
    %31 = arith.subf %30, %23 : vector<8x128xf32>
    %32 = arith.mulf %31, %29 : vector<8x128xf32>
    %c0_16 = arith.constant 0 : index
    %c0_17 = arith.constant 0 : index
    %33 = vector.load %arg2[%c0_16, %c0_17] : memref<128x384xbf16, #tpu.memory_space<vmem>>, vector<128x384xbf16>
    %c0_18 = arith.constant 0 : index
    %c0_19 = arith.constant 0 : index
    %34 = vector.load %arg4[%c0_18, %c0_19] : memref<1x128xf32, #tpu.memory_space<vmem>>, vector<1x128xf32>
    %35 = vector.shape_cast %34 : vector<1x128xf32> to vector<1x128xf32>
    %36 = vector.broadcast %35 : vector<1x128xf32> to vector<8x128xf32>
    %cst_20 = arith.constant 0.000000e+00 : f32
    %37 = vector.broadcast %cst_20 : f32 to vector<8x128xf32>
    %38 = vector.extract_strided_slice %5 {offsets = [0, 0], sizes = [8, 384], strides = [1, 1]} : vector<64x384xf32> to vector<8x384xf32>
    %39 = arith.truncf %37 : vector<8x128xf32> to vector<8x128xbf16>
    %cst_21 = arith.constant dense<0.000000e+00> : vector<8x384xf32>
    %40 = tpu.matmul %39, %33, %cst_21 {dimension_numbers = #tpu.dot_dimension_numbers<[1], [0], [0], [1], [0, 0, 1, 1], [], []>} : vector<8x128xbf16>, vector<128x384xbf16>, vector<8x384xf32> -> vector<8x384xf32>
    %41 = vector.extract_strided_slice %38 {offsets = [0, 0], sizes = [8, 128], strides = [1, 1]} : vector<8x384xf32> to vector<8x128xf32>
    %42 = vector.extract_strided_slice %40 {offsets = [0, 0], sizes = [8, 128], strides = [1, 1]} : vector<8x384xf32> to vector<8x128xf32>
    %43 = arith.addf %41, %42 : vector<8x128xf32>
    %44 = arith.negf %43 : vector<8x128xf32>
    %45 = math.exp %44 : vector<8x128xf32>
    %cst_22 = arith.constant 1.000000e+00 : f32
    %46 = vector.broadcast %cst_22 : f32 to vector<8x128xf32>
    %47 = arith.addf %46, %45 : vector<8x128xf32>
    %48 = arith.divf %46, %47 : vector<8x128xf32>
    %49 = vector.extract_strided_slice %38 {offsets = [0, 128], sizes = [8, 128], strides = [1, 1]} : vector<8x384xf32> to vector<8x128xf32>
    %50 = vector.extract_strided_slice %40 {offsets = [0, 128], sizes = [8, 128], strides = [1, 1]} : vector<8x384xf32> to vector<8x128xf32>
    %51 = arith.addf %49, %50 : vector<8x128xf32>
    %52 = arith.negf %51 : vector<8x128xf32>
    %53 = math.exp %52 : vector<8x128xf32>
    %cst_23 = arith.constant 1.000000e+00 : f32
    %54 = vector.broadcast %cst_23 : f32 to vector<8x128xf32>
    %55 = arith.addf %54, %53 : vector<8x128xf32>
    %56 = arith.divf %54, %55 : vector<8x128xf32>
    %57 = vector.extract_strided_slice %38 {offsets = [0, 256], sizes = [8, 128], strides = [1, 1]} : vector<8x384xf32> to vector<8x128xf32>
    %58 = vector.extract_strided_slice %40 {offsets = [0, 256], sizes = [8, 128], strides = [1, 1]} : vector<8x384xf32> to vector<8x128xf32>
    %59 = arith.addf %58, %36 : vector<8x128xf32>
    %60 = arith.mulf %48, %59 : vector<8x128xf32>
    %61 = arith.addf %57, %60 : vector<8x128xf32>
    %62 = math.tanh %61 : vector<8x128xf32>
    %cst_24 = arith.constant 1.000000e+00 : f32
    %63 = vector.broadcast %cst_24 : f32 to vector<8x128xf32>
    %64 = arith.subf %63, %56 : vector<8x128xf32>
    %65 = arith.mulf %64, %62 : vector<8x128xf32>
    %66 = arith.mulf %56, %37 : vector<8x128xf32>
    %67 = arith.addf %65, %66 : vector<8x128xf32>
    %68 = vector.extract_strided_slice %5 {offsets = [8, 0], sizes = [8, 384], strides = [1, 1]} : vector<64x384xf32> to vector<8x384xf32>
    %69 = arith.truncf %67 : vector<8x128xf32> to vector<8x128xbf16>
    %cst_25 = arith.constant dense<0.000000e+00> : vector<8x384xf32>
    %70 = tpu.matmul %69, %33, %cst_25 {dimension_numbers = #tpu.dot_dimension_numbers<[1], [0], [0], [1], [0, 0, 1, 1], [], []>} : vector<8x128xbf16>, vector<128x384xbf16>, vector<8x384xf32> -> vector<8x384xf32>
    %71 = vector.extract_strided_slice %68 {offsets = [0, 0], sizes = [8, 128], strides = [1, 1]} : vector<8x384xf32> to vector<8x128xf32>
    %72 = vector.extract_strided_slice %70 {offsets = [0, 0], sizes = [8, 128], strides = [1, 1]} : vector<8x384xf32> to vector<8x128xf32>
    %73 = arith.addf %71, %72 : vector<8x128xf32>
    %74 = arith.negf %73 : vector<8x128xf32>
    %75 = math.exp %74 : vector<8x128xf32>
    %cst_26 = arith.constant 1.000000e+00 : f32
    %76 = vector.broadcast %cst_26 : f32 to vector<8x128xf32>
    %77 = arith.addf %76, %75 : vector<8x128xf32>
    %78 = arith.divf %76, %77 : vector<8x128xf32>
    %79 = vector.extract_strided_slice %68 {offsets = [0, 128], sizes = [8, 128], strides = [1, 1]} : vector<8x384xf32> to vector<8x128xf32>
    %80 = vector.extract_strided_slice %70 {offsets = [0, 128], sizes = [8, 128], strides = [1, 1]} : vector<8x384xf32> to vector<8x128xf32>
    %81 = arith.addf %79, %80 : vector<8x128xf32>
    %82 = arith.negf %81 : vector<8x128xf32>
    %83 = math.exp %82 : vector<8x128xf32>
    %cst_27 = arith.constant 1.000000e+00 : f32
    %84 = vector.broadcast %cst_27 : f32 to vector<8x128xf32>
    %85 = arith.addf %84, %83 : vector<8x128xf32>
    %86 = arith.divf %84, %85 : vector<8x128xf32>
    %87 = vector.extract_strided_slice %68 {offsets = [0, 256], sizes = [8, 128], strides = [1, 1]} : vector<8x384xf32> to vector<8x128xf32>
    %88 = vector.extract_strided_slice %70 {offsets = [0, 256], sizes = [8, 128], strides = [1, 1]} : vector<8x384xf32> to vector<8x128xf32>
    %89 = arith.addf %88, %36 : vector<8x128xf32>
    %90 = arith.mulf %78, %89 : vector<8x128xf32>
    %91 = arith.addf %87, %90 : vector<8x128xf32>
    %92 = math.tanh %91 : vector<8x128xf32>
    %cst_28 = arith.constant 1.000000e+00 : f32
    %93 = vector.broadcast %cst_28 : f32 to vector<8x128xf32>
    %94 = arith.subf %93, %86 : vector<8x128xf32>
    %95 = arith.mulf %94, %92 : vector<8x128xf32>
    %96 = arith.mulf %86, %67 : vector<8x128xf32>
    %97 = arith.addf %95, %96 : vector<8x128xf32>
    %98 = vector.extract_strided_slice %5 {offsets = [16, 0], sizes = [8, 384], strides = [1, 1]} : vector<64x384xf32> to vector<8x384xf32>
    %99 = arith.truncf %97 : vector<8x128xf32> to vector<8x128xbf16>
    %cst_29 = arith.constant dense<0.000000e+00> : vector<8x384xf32>
    %100 = tpu.matmul %99, %33, %cst_29 {dimension_numbers = #tpu.dot_dimension_numbers<[1], [0], [0], [1], [0, 0, 1, 1], [], []>} : vector<8x128xbf16>, vector<128x384xbf16>, vector<8x384xf32> -> vector<8x384xf32>
    %101 = vector.extract_strided_slice %98 {offsets = [0, 0], sizes = [8, 128], strides = [1, 1]} : vector<8x384xf32> to vector<8x128xf32>
    %102 = vector.extract_strided_slice %100 {offsets = [0, 0], sizes = [8, 128], strides = [1, 1]} : vector<8x384xf32> to vector<8x128xf32>
    %103 = arith.addf %101, %102 : vector<8x128xf32>
    %104 = arith.negf %103 : vector<8x128xf32>
    %105 = math.exp %104 : vector<8x128xf32>
    %cst_30 = arith.constant 1.000000e+00 : f32
    %106 = vector.broadcast %cst_30 : f32 to vector<8x128xf32>
    %107 = arith.addf %106, %105 : vector<8x128xf32>
    %108 = arith.divf %106, %107 : vector<8x128xf32>
    %109 = vector.extract_strided_slice %98 {offsets = [0, 128], sizes = [8, 128], strides = [1, 1]} : vector<8x384xf32> to vector<8x128xf32>
    %110 = vector.extract_strided_slice %100 {offsets = [0, 128], sizes = [8, 128], strides = [1, 1]} : vector<8x384xf32> to vector<8x128xf32>
    %111 = arith.addf %109, %110 : vector<8x128xf32>
    %112 = arith.negf %111 : vector<8x128xf32>
    %113 = math.exp %112 : vector<8x128xf32>
    %cst_31 = arith.constant 1.000000e+00 : f32
    %114 = vector.broadcast %cst_31 : f32 to vector<8x128xf32>
    %115 = arith.addf %114, %113 : vector<8x128xf32>
    %116 = arith.divf %114, %115 : vector<8x128xf32>
    %117 = vector.extract_strided_slice %98 {offsets = [0, 256], sizes = [8, 128], strides = [1, 1]} : vector<8x384xf32> to vector<8x128xf32>
    %118 = vector.extract_strided_slice %100 {offsets = [0, 256], sizes = [8, 128], strides = [1, 1]} : vector<8x384xf32> to vector<8x128xf32>
    %119 = arith.addf %118, %36 : vector<8x128xf32>
    %120 = arith.mulf %108, %119 : vector<8x128xf32>
    %121 = arith.addf %117, %120 : vector<8x128xf32>
    %122 = math.tanh %121 : vector<8x128xf32>
    %cst_32 = arith.constant 1.000000e+00 : f32
    %123 = vector.broadcast %cst_32 : f32 to vector<8x128xf32>
    %124 = arith.subf %123, %116 : vector<8x128xf32>
    %125 = arith.mulf %124, %122 : vector<8x128xf32>
    %126 = arith.mulf %116, %97 : vector<8x128xf32>
    %127 = arith.addf %125, %126 : vector<8x128xf32>
    %128 = vector.extract_strided_slice %5 {offsets = [24, 0], sizes = [8, 384], strides = [1, 1]} : vector<64x384xf32> to vector<8x384xf32>
    %129 = arith.truncf %127 : vector<8x128xf32> to vector<8x128xbf16>
    %cst_33 = arith.constant dense<0.000000e+00> : vector<8x384xf32>
    %130 = tpu.matmul %129, %33, %cst_33 {dimension_numbers = #tpu.dot_dimension_numbers<[1], [0], [0], [1], [0, 0, 1, 1], [], []>} : vector<8x128xbf16>, vector<128x384xbf16>, vector<8x384xf32> -> vector<8x384xf32>
    %131 = vector.extract_strided_slice %128 {offsets = [0, 0], sizes = [8, 128], strides = [1, 1]} : vector<8x384xf32> to vector<8x128xf32>
    %132 = vector.extract_strided_slice %130 {offsets = [0, 0], sizes = [8, 128], strides = [1, 1]} : vector<8x384xf32> to vector<8x128xf32>
    %133 = arith.addf %131, %132 : vector<8x128xf32>
    %134 = arith.negf %133 : vector<8x128xf32>
    %135 = math.exp %134 : vector<8x128xf32>
    %cst_34 = arith.constant 1.000000e+00 : f32
    %136 = vector.broadcast %cst_34 : f32 to vector<8x128xf32>
    %137 = arith.addf %136, %135 : vector<8x128xf32>
    %138 = arith.divf %136, %137 : vector<8x128xf32>
    %139 = vector.extract_strided_slice %128 {offsets = [0, 128], sizes = [8, 128], strides = [1, 1]} : vector<8x384xf32> to vector<8x128xf32>
    %140 = vector.extract_strided_slice %130 {offsets = [0, 128], sizes = [8, 128], strides = [1, 1]} : vector<8x384xf32> to vector<8x128xf32>
    %141 = arith.addf %139, %140 : vector<8x128xf32>
    %142 = arith.negf %141 : vector<8x128xf32>
    %143 = math.exp %142 : vector<8x128xf32>
    %cst_35 = arith.constant 1.000000e+00 : f32
    %144 = vector.broadcast %cst_35 : f32 to vector<8x128xf32>
    %145 = arith.addf %144, %143 : vector<8x128xf32>
    %146 = arith.divf %144, %145 : vector<8x128xf32>
    %147 = vector.extract_strided_slice %128 {offsets = [0, 256], sizes = [8, 128], strides = [1, 1]} : vector<8x384xf32> to vector<8x128xf32>
    %148 = vector.extract_strided_slice %130 {offsets = [0, 256], sizes = [8, 128], strides = [1, 1]} : vector<8x384xf32> to vector<8x128xf32>
    %149 = arith.addf %148, %36 : vector<8x128xf32>
    %150 = arith.mulf %138, %149 : vector<8x128xf32>
    %151 = arith.addf %147, %150 : vector<8x128xf32>
    %152 = math.tanh %151 : vector<8x128xf32>
    %cst_36 = arith.constant 1.000000e+00 : f32
    %153 = vector.broadcast %cst_36 : f32 to vector<8x128xf32>
    %154 = arith.subf %153, %146 : vector<8x128xf32>
    %155 = arith.mulf %154, %152 : vector<8x128xf32>
    %156 = arith.mulf %146, %127 : vector<8x128xf32>
    %157 = arith.addf %155, %156 : vector<8x128xf32>
    %158 = vector.extract_strided_slice %5 {offsets = [32, 0], sizes = [8, 384], strides = [1, 1]} : vector<64x384xf32> to vector<8x384xf32>
    %159 = arith.truncf %157 : vector<8x128xf32> to vector<8x128xbf16>
    %cst_37 = arith.constant dense<0.000000e+00> : vector<8x384xf32>
    %160 = tpu.matmul %159, %33, %cst_37 {dimension_numbers = #tpu.dot_dimension_numbers<[1], [0], [0], [1], [0, 0, 1, 1], [], []>} : vector<8x128xbf16>, vector<128x384xbf16>, vector<8x384xf32> -> vector<8x384xf32>
    %161 = vector.extract_strided_slice %158 {offsets = [0, 0], sizes = [8, 128], strides = [1, 1]} : vector<8x384xf32> to vector<8x128xf32>
    %162 = vector.extract_strided_slice %160 {offsets = [0, 0], sizes = [8, 128], strides = [1, 1]} : vector<8x384xf32> to vector<8x128xf32>
    %163 = arith.addf %161, %162 : vector<8x128xf32>
    %164 = arith.negf %163 : vector<8x128xf32>
    %165 = math.exp %164 : vector<8x128xf32>
    %cst_38 = arith.constant 1.000000e+00 : f32
    %166 = vector.broadcast %cst_38 : f32 to vector<8x128xf32>
    %167 = arith.addf %166, %165 : vector<8x128xf32>
    %168 = arith.divf %166, %167 : vector<8x128xf32>
    %169 = vector.extract_strided_slice %158 {offsets = [0, 128], sizes = [8, 128], strides = [1, 1]} : vector<8x384xf32> to vector<8x128xf32>
    %170 = vector.extract_strided_slice %160 {offsets = [0, 128], sizes = [8, 128], strides = [1, 1]} : vector<8x384xf32> to vector<8x128xf32>
    %171 = arith.addf %169, %170 : vector<8x128xf32>
    %172 = arith.negf %171 : vector<8x128xf32>
    %173 = math.exp %172 : vector<8x128xf32>
    %cst_39 = arith.constant 1.000000e+00 : f32
    %174 = vector.broadcast %cst_39 : f32 to vector<8x128xf32>
    %175 = arith.addf %174, %173 : vector<8x128xf32>
    %176 = arith.divf %174, %175 : vector<8x128xf32>
    %177 = vector.extract_strided_slice %158 {offsets = [0, 256], sizes = [8, 128], strides = [1, 1]} : vector<8x384xf32> to vector<8x128xf32>
    %178 = vector.extract_strided_slice %160 {offsets = [0, 256], sizes = [8, 128], strides = [1, 1]} : vector<8x384xf32> to vector<8x128xf32>
    %179 = arith.addf %178, %36 : vector<8x128xf32>
    %180 = arith.mulf %168, %179 : vector<8x128xf32>
    %181 = arith.addf %177, %180 : vector<8x128xf32>
    %182 = math.tanh %181 : vector<8x128xf32>
    %cst_40 = arith.constant 1.000000e+00 : f32
    %183 = vector.broadcast %cst_40 : f32 to vector<8x128xf32>
    %184 = arith.subf %183, %176 : vector<8x128xf32>
    %185 = arith.mulf %184, %182 : vector<8x128xf32>
    %186 = arith.mulf %176, %157 : vector<8x128xf32>
    %187 = arith.addf %185, %186 : vector<8x128xf32>
    %188 = vector.extract_strided_slice %5 {offsets = [40, 0], sizes = [8, 384], strides = [1, 1]} : vector<64x384xf32> to vector<8x384xf32>
    %189 = arith.truncf %187 : vector<8x128xf32> to vector<8x128xbf16>
    %cst_41 = arith.constant dense<0.000000e+00> : vector<8x384xf32>
    %190 = tpu.matmul %189, %33, %cst_41 {dimension_numbers = #tpu.dot_dimension_numbers<[1], [0], [0], [1], [0, 0, 1, 1], [], []>} : vector<8x128xbf16>, vector<128x384xbf16>, vector<8x384xf32> -> vector<8x384xf32>
    %191 = vector.extract_strided_slice %188 {offsets = [0, 0], sizes = [8, 128], strides = [1, 1]} : vector<8x384xf32> to vector<8x128xf32>
    %192 = vector.extract_strided_slice %190 {offsets = [0, 0], sizes = [8, 128], strides = [1, 1]} : vector<8x384xf32> to vector<8x128xf32>
    %193 = arith.addf %191, %192 : vector<8x128xf32>
    %194 = arith.negf %193 : vector<8x128xf32>
    %195 = math.exp %194 : vector<8x128xf32>
    %cst_42 = arith.constant 1.000000e+00 : f32
    %196 = vector.broadcast %cst_42 : f32 to vector<8x128xf32>
    %197 = arith.addf %196, %195 : vector<8x128xf32>
    %198 = arith.divf %196, %197 : vector<8x128xf32>
    %199 = vector.extract_strided_slice %188 {offsets = [0, 128], sizes = [8, 128], strides = [1, 1]} : vector<8x384xf32> to vector<8x128xf32>
    %200 = vector.extract_strided_slice %190 {offsets = [0, 128], sizes = [8, 128], strides = [1, 1]} : vector<8x384xf32> to vector<8x128xf32>
    %201 = arith.addf %199, %200 : vector<8x128xf32>
    %202 = arith.negf %201 : vector<8x128xf32>
    %203 = math.exp %202 : vector<8x128xf32>
    %cst_43 = arith.constant 1.000000e+00 : f32
    %204 = vector.broadcast %cst_43 : f32 to vector<8x128xf32>
    %205 = arith.addf %204, %203 : vector<8x128xf32>
    %206 = arith.divf %204, %205 : vector<8x128xf32>
    %207 = vector.extract_strided_slice %188 {offsets = [0, 256], sizes = [8, 128], strides = [1, 1]} : vector<8x384xf32> to vector<8x128xf32>
    %208 = vector.extract_strided_slice %190 {offsets = [0, 256], sizes = [8, 128], strides = [1, 1]} : vector<8x384xf32> to vector<8x128xf32>
    %209 = arith.addf %208, %36 : vector<8x128xf32>
    %210 = arith.mulf %198, %209 : vector<8x128xf32>
    %211 = arith.addf %207, %210 : vector<8x128xf32>
    %212 = math.tanh %211 : vector<8x128xf32>
    %cst_44 = arith.constant 1.000000e+00 : f32
    %213 = vector.broadcast %cst_44 : f32 to vector<8x128xf32>
    %214 = arith.subf %213, %206 : vector<8x128xf32>
    %215 = arith.mulf %214, %212 : vector<8x128xf32>
    %216 = arith.mulf %206, %187 : vector<8x128xf32>
    %217 = arith.addf %215, %216 : vector<8x128xf32>
    %218 = vector.extract_strided_slice %5 {offsets = [48, 0], sizes = [8, 384], strides = [1, 1]} : vector<64x384xf32> to vector<8x384xf32>
    %219 = arith.truncf %217 : vector<8x128xf32> to vector<8x128xbf16>
    %cst_45 = arith.constant dense<0.000000e+00> : vector<8x384xf32>
    %220 = tpu.matmul %219, %33, %cst_45 {dimension_numbers = #tpu.dot_dimension_numbers<[1], [0], [0], [1], [0, 0, 1, 1], [], []>} : vector<8x128xbf16>, vector<128x384xbf16>, vector<8x384xf32> -> vector<8x384xf32>
    %221 = vector.extract_strided_slice %218 {offsets = [0, 0], sizes = [8, 128], strides = [1, 1]} : vector<8x384xf32> to vector<8x128xf32>
    %222 = vector.extract_strided_slice %220 {offsets = [0, 0], sizes = [8, 128], strides = [1, 1]} : vector<8x384xf32> to vector<8x128xf32>
    %223 = arith.addf %221, %222 : vector<8x128xf32>
    %224 = arith.negf %223 : vector<8x128xf32>
    %225 = math.exp %224 : vector<8x128xf32>
    %cst_46 = arith.constant 1.000000e+00 : f32
    %226 = vector.broadcast %cst_46 : f32 to vector<8x128xf32>
    %227 = arith.addf %226, %225 : vector<8x128xf32>
    %228 = arith.divf %226, %227 : vector<8x128xf32>
    %229 = vector.extract_strided_slice %218 {offsets = [0, 128], sizes = [8, 128], strides = [1, 1]} : vector<8x384xf32> to vector<8x128xf32>
    %230 = vector.extract_strided_slice %220 {offsets = [0, 128], sizes = [8, 128], strides = [1, 1]} : vector<8x384xf32> to vector<8x128xf32>
    %231 = arith.addf %229, %230 : vector<8x128xf32>
    %232 = arith.negf %231 : vector<8x128xf32>
    %233 = math.exp %232 : vector<8x128xf32>
    %cst_47 = arith.constant 1.000000e+00 : f32
    %234 = vector.broadcast %cst_47 : f32 to vector<8x128xf32>
    %235 = arith.addf %234, %233 : vector<8x128xf32>
    %236 = arith.divf %234, %235 : vector<8x128xf32>
    %237 = vector.extract_strided_slice %218 {offsets = [0, 256], sizes = [8, 128], strides = [1, 1]} : vector<8x384xf32> to vector<8x128xf32>
    %238 = vector.extract_strided_slice %220 {offsets = [0, 256], sizes = [8, 128], strides = [1, 1]} : vector<8x384xf32> to vector<8x128xf32>
    %239 = arith.addf %238, %36 : vector<8x128xf32>
    %240 = arith.mulf %228, %239 : vector<8x128xf32>
    %241 = arith.addf %237, %240 : vector<8x128xf32>
    %242 = math.tanh %241 : vector<8x128xf32>
    %cst_48 = arith.constant 1.000000e+00 : f32
    %243 = vector.broadcast %cst_48 : f32 to vector<8x128xf32>
    %244 = arith.subf %243, %236 : vector<8x128xf32>
    %245 = arith.mulf %244, %242 : vector<8x128xf32>
    %246 = arith.mulf %236, %217 : vector<8x128xf32>
    %247 = arith.addf %245, %246 : vector<8x128xf32>
    %248 = vector.extract_strided_slice %5 {offsets = [56, 0], sizes = [8, 384], strides = [1, 1]} : vector<64x384xf32> to vector<8x384xf32>
    %249 = arith.truncf %247 : vector<8x128xf32> to vector<8x128xbf16>
    %cst_49 = arith.constant dense<0.000000e+00> : vector<8x384xf32>
    %250 = tpu.matmul %249, %33, %cst_49 {dimension_numbers = #tpu.dot_dimension_numbers<[1], [0], [0], [1], [0, 0, 1, 1], [], []>} : vector<8x128xbf16>, vector<128x384xbf16>, vector<8x384xf32> -> vector<8x384xf32>
    %251 = vector.extract_strided_slice %248 {offsets = [0, 0], sizes = [8, 128], strides = [1, 1]} : vector<8x384xf32> to vector<8x128xf32>
    %252 = vector.extract_strided_slice %250 {offsets = [0, 0], sizes = [8, 128], strides = [1, 1]} : vector<8x384xf32> to vector<8x128xf32>
    %253 = arith.addf %251, %252 : vector<8x128xf32>
    %254 = arith.negf %253 : vector<8x128xf32>
    %255 = math.exp %254 : vector<8x128xf32>
    %cst_50 = arith.constant 1.000000e+00 : f32
    %256 = vector.broadcast %cst_50 : f32 to vector<8x128xf32>
    %257 = arith.addf %256, %255 : vector<8x128xf32>
    %258 = arith.divf %256, %257 : vector<8x128xf32>
    %259 = vector.extract_strided_slice %248 {offsets = [0, 128], sizes = [8, 128], strides = [1, 1]} : vector<8x384xf32> to vector<8x128xf32>
    %260 = vector.extract_strided_slice %250 {offsets = [0, 128], sizes = [8, 128], strides = [1, 1]} : vector<8x384xf32> to vector<8x128xf32>
    %261 = arith.addf %259, %260 : vector<8x128xf32>
    %262 = arith.negf %261 : vector<8x128xf32>
    %263 = math.exp %262 : vector<8x128xf32>
    %cst_51 = arith.constant 1.000000e+00 : f32
    %264 = vector.broadcast %cst_51 : f32 to vector<8x128xf32>
    %265 = arith.addf %264, %263 : vector<8x128xf32>
    %266 = arith.divf %264, %265 : vector<8x128xf32>
    %267 = vector.extract_strided_slice %248 {offsets = [0, 256], sizes = [8, 128], strides = [1, 1]} : vector<8x384xf32> to vector<8x128xf32>
    %268 = vector.extract_strided_slice %250 {offsets = [0, 256], sizes = [8, 128], strides = [1, 1]} : vector<8x384xf32> to vector<8x128xf32>
    %269 = arith.addf %268, %36 : vector<8x128xf32>
    %270 = arith.mulf %258, %269 : vector<8x128xf32>
    %271 = arith.addf %267, %270 : vector<8x128xf32>
    %272 = math.tanh %271 : vector<8x128xf32>
    %cst_52 = arith.constant 1.000000e+00 : f32
    %273 = vector.broadcast %cst_52 : f32 to vector<8x128xf32>
    %274 = arith.subf %273, %266 : vector<8x128xf32>
    %275 = arith.mulf %274, %272 : vector<8x128xf32>
    %276 = arith.mulf %266, %247 : vector<8x128xf32>
    %277 = arith.addf %275, %276 : vector<8x128xf32>
    %278 = arith.truncf %277 : vector<8x128xf32> to vector<8x128xbf16>
    %c0_53 = arith.constant 0 : index
    %c0_54 = arith.constant 0 : index
    %279 = vector.load %arg8[%c0_53, %c0_54] : memref<128x256xbf16, #tpu.memory_space<vmem>>, vector<128x256xbf16>
    %cst_55 = arith.constant dense<0.000000e+00> : vector<8x256xf32>
    %280 = tpu.matmul %278, %279, %cst_55 {dimension_numbers = #tpu.dot_dimension_numbers<[1], [0], [0], [1], [0, 0, 1, 1], [], []>} : vector<8x128xbf16>, vector<128x256xbf16>, vector<8x256xf32> -> vector<8x256xf32>
    %281 = arith.truncf %32 : vector<8x128xf32> to vector<8x128xbf16>
    %c0_56 = arith.constant 0 : index
    %c0_57 = arith.constant 0 : index
    %282 = vector.load %arg9[%c0_56, %c0_57] : memref<128x256xbf16, #tpu.memory_space<vmem>>, vector<128x256xbf16>
    %cst_58 = arith.constant dense<0.000000e+00> : vector<8x256xf32>
    %283 = tpu.matmul %281, %282, %cst_58 {dimension_numbers = #tpu.dot_dimension_numbers<[1], [0], [0], [1], [0, 0, 1, 1], [], []>} : vector<8x128xbf16>, vector<128x256xbf16>, vector<8x256xf32> -> vector<8x256xf32>
    %284 = arith.addf %280, %283 : vector<8x256xf32>
    %c0_59 = arith.constant 0 : index
    %c0_60 = arith.constant 0 : index
    %285 = vector.load %arg10[%c0_59, %c0_60] : memref<1x256xf32, #tpu.memory_space<vmem>>, vector<1x256xf32>
    %286 = vector.broadcast %285 : vector<1x256xf32> to vector<8x256xf32>
    %287 = arith.addf %284, %286 : vector<8x256xf32>
    %288 = vector.extract_strided_slice %287 {offsets = [0, 0], sizes = [8, 5], strides = [1, 1]} : vector<8x256xf32> to vector<8x5xf32>
    %289 = math.absf %288 : vector<8x5xf32>
    %c0_61 = arith.constant 0 : index
    %c0_62 = arith.constant 0 : index
    %290 = vector.load %arg11[%c0_61, %c0_62] : memref<8x5xf32, #tpu.memory_space<vmem>>, vector<8x5xf32>
    tpu.vector_store %arg11[%c0_61, %c0_62], %289 {strides = array<i32>} : memref<8x5xf32, #tpu.memory_space<vmem>>, vector<8x5xf32>,
    %291 = vector.extract_strided_slice %287 {offsets = [0, 128], sizes = [8, 5], strides = [1, 1]} : vector<8x256xf32> to vector<8x5xf32>
    %292 = arith.negf %291 : vector<8x5xf32>
    %293 = math.exp %292 : vector<8x5xf32>
    %cst_63 = arith.constant 1.000000e+00 : f32
    %294 = vector.broadcast %cst_63 : f32 to vector<8x5xf32>
    %295 = arith.addf %294, %293 : vector<8x5xf32>
    %296 = arith.divf %294, %295 : vector<8x5xf32>
    %c0_64 = arith.constant 0 : index
    %c0_65 = arith.constant 0 : index
    %297 = vector.load %arg12[%c0_64, %c0_65] : memref<8x5xf32, #tpu.memory_space<vmem>>, vector<8x5xf32>
    tpu.vector_store %arg12[%c0_64, %c0_65], %296 {strides = array<i32>} : memref<8x5xf32, #tpu.memory_space<vmem>>, vector<8x5xf32>,
    return
  }
}

</mosaic_0001>

<llo_original>
// kernel: tpu_custom_call.1
$region0: #{tpu_custom_call.1}
  #allocation0 [shape = 'u32[]', space=smem, size = 0x4, offset = 0x4, fixed_abs, tag = 'smem constant byte address 0x4 - core index']
  #allocation1 [shape = 'u32[144,128]{1,0:T(1,128)}', space=vmem, size = 0x12000, scoped, tag = 'internal scratch']
  %s0 = inlined_call_operand.hbm [shape: bf16[64,64], index: 0, kind: input, shape index: {}]
  %s1 = inlined_call_operand.hbm [shape: bf16[64,384], index: 1, kind: input, shape index: {}]
  %s2 = inlined_call_operand.hbm [shape: bf16[128,384], index: 2, kind: input, shape index: {}]
  %s3 = inlined_call_operand.vmem [shape: f32[1,384], index: 3, kind: input, shape index: {}]
  %s4 = inlined_call_operand.vmem [shape: f32[1,128], index: 4, kind: input, shape index: {}]
  %s5 = inlined_call_operand.hbm [shape: bf16[64,384], index: 5, kind: input, shape index: {}]
  %s6 = inlined_call_operand.vmem [shape: f32[1,384], index: 6, kind: input, shape index: {}]
  %s7 = inlined_call_operand.vmem [shape: f32[1,128], index: 7, kind: input, shape index: {}]
  %s8 = inlined_call_operand.hbm [shape: bf16[128,256], index: 8, kind: input, shape index: {}]
  %s9 = inlined_call_operand.hbm [shape: bf16[128,256], index: 9, kind: input, shape index: {}]
  %s10 = inlined_call_operand.vmem [shape: f32[1,256], index: 10, kind: input, shape index: {}]
  %s11 = inlined_call_operand.hbm [shape: f32[8,5], index: 11, kind: output, shape index: {0}]
  %s12 = inlined_call_operand.hbm [shape: f32[8,5], index: 12, kind: output, shape index: {1}]
  %13 = xla_tuple %s11, %s12
  %s14 = sld [smem:[#allocation0]]
  $region86: #{tpu_custom_call.1} parent=0
    _
  %s16 = ssub.s32 1, %s14
  %s17 = scalar_select 0, %s16, %s14
  $region1: #{tpu_custom_call.1} parent=0
    #allocation2 [shape = 'u8[16384]{0}', space=vmem, size = 0x4000, scoped, tag = 'input window, operand 0, single buffered']
    #allocation3 [shape = 's32[1]{0}', space=sflag, size = 0x4, scoped, tag = 'scoped memory for tpu_custom_call.1']
    #allocation4 [shape = 's32[1]{0}', space=sflag, size = 0x4, scoped, tag = 'scoped memory for tpu_custom_call.1']
    #allocation5 [shape = 'u8[49152]{0}', space=vmem, size = 0xc000, scoped, tag = 'input window, operand 1, single buffered']
    #allocation6 [shape = 's32[1]{0}', space=sflag, size = 0x4, scoped, tag = 'scoped memory for tpu_custom_call.1']
    #allocation7 [shape = 'u8[98304]{0}', space=vmem, size = 0x18000, scoped, tag = 'input window, operand 2, single buffered']
    #allocation8 [shape = 'u8[49152]{0}', space=vmem, size = 0xc000, scoped, tag = 'input window, operand 5, single buffered']
    #allocation9 [shape = 's32[1]{0}', space=sflag, size = 0x4, scoped, tag = 'scoped memory for tpu_custom_call.1']
    #allocation10 [shape = 'u8[65536]{0}', space=vmem, size = 0x10000, scoped, tag = 'input window, operand 8, single buffered']
    #allocation11 [shape = 'u8[65536]{0}', space=vmem, size = 0x10000, scoped, tag = 'input window, operand 9, single buffered']
    #allocation12 [shape = 's32[1]{0}', space=sflag, size = 0x4, scoped, tag = 'scoped memory for tpu_custom_call.1']
    #allocation13 [shape = 'u8[4096]{0}', space=vmem, size = 0x1000, scoped, tag = 'output window, operand 0, single buffered']
    #allocation14 [shape = 'u8[4096]{0}', space=vmem, size = 0x1000, scoped, tag = 'output window, operand 1, single buffered']
    #allocation15 [shape = 's32[1]{0}', space=sflag, size = 0x4, scoped, tag = 'scoped memory for tpu_custom_call.1']
    %18 = vsyncpa [#allocation3], 0
    %19 = vsyncpa [#allocation6], 0
    %20 = vsyncpa [#allocation9], 0
    %21 = vsyncpa [#allocation12], 0
    %22 = vsyncpa [#allocation4], 0
    %23 = vsyncpa [#allocation15], 0
    // Predicated region
    $region2: #{tpu_custom_call.1} parent=1 // pred_check
      _
    $region3: #{tpu_custom_call.1} parent=1 // pred_check_branch
      %25 = sbr.rel (0) target = $region5
    $region4: #{tpu_custom_call.1} parent=1 // pred_region
      %s27 = ssub.s32 512, 512
      %28 = vsyncadd [#allocation3], %s27
      %s29 = sshll.u32 [#allocation2], 4
      %s30 = int_to_ptr.vmem [resolvable:$true] %s29
      %35 = dma.hbm_to_vmem [thread:$0]  %s0, 512, %s30, [#allocation3], 64, 64, 4
    $region5: #{tpu_custom_call.1} parent=1 // pred_fallthru
      _
    // Predicated region
    $region6: #{tpu_custom_call.1} parent=1 // pred_check
      _
    $region7: #{tpu_custom_call.1} parent=1 // pred_check_branch
      %37 = sbr.rel (0) target = $region9
    $region8: #{tpu_custom_call.1} parent=1 // pred_region
      %s39 = ssub.s32 1536, 1536
      %40 = vsyncadd [#allocation6], %s39
      %s41 = sshll.u32 [#allocation5], 4
      %s42 = int_to_ptr.vmem [resolvable:$true] %s41
      %47 = dma.hbm_to_vmem [thread:$0]  %s1, 1536, %s42, [#allocation6], 192, 192, 12
    $region9: #{tpu_custom_call.1} parent=1 // pred_fallthru
      _
    // Predicated region
    $region10: #{tpu_custom_call.1} parent=1 // pred_check
      _
    $region11: #{tpu_custom_call.1} parent=1 // pred_check_branch
      %49 = sbr.rel (0) target = $region13
    $region12: #{tpu_custom_call.1} parent=1 // pred_region
      %s51 = ssub.s32 3072, 3072
      %52 = vsyncadd [#allocation6], %s51
      %s53 = sshll.u32 [#allocation7], 4
      %s54 = int_to_ptr.vmem [resolvable:$true] %s53
      %59 = dma.hbm_to_vmem [thread:$0]  %s2, 3072, %s54, [#allocation6], 192, 192, 12
    $region13: #{tpu_custom_call.1} parent=1 // pred_fallthru
      _
    // Predicated region
    $region14: #{tpu_custom_call.1} parent=1 // pred_check
      _
    $region15: #{tpu_custom_call.1} parent=1 // pred_check_branch
      %61 = sbr.rel (0) target = $region17
    $region16: #{tpu_custom_call.1} parent=1 // pred_region
      _
    $region17: #{tpu_custom_call.1} parent=1 // pred_fallthru
      _
    // Predicated region
    $region18: #{tpu_custom_call.1} parent=1 // pred_check
      _
    $region19: #{tpu_custom_call.1} parent=1 // pred_check_branch
      %63 = sbr.rel (0) target = $region21
    $region20: #{tpu_custom_call.1} parent=1 // pred_region
      _
    $region21: #{tpu_custom_call.1} parent=1 // pred_fallthru
      _
    // Predicated region
    $region22: #{tpu_custom_call.1} parent=1 // pred_check
      _
    $region23: #{tpu_custom_call.1} parent=1 // pred_check_branch
      %65 = sbr.rel (0) target = $region25
    $region24: #{tpu_custom_call.1} parent=1 // pred_region
      %s67 = ssub.s32 1536, 1536
      %68 = vsyncadd [#allocation9], %s67
      %s69 = sshll.u32 [#allocation8], 4
      %s70 = int_to_ptr.vmem [resolvable:$true] %s69
      %75 = dma.hbm_to_vmem [thread:$0]  %s5, 1536, %s70, [#allocation9], 192, 192, 12
    $region25: #{tpu_custom_call.1} parent=1 // pred_fallthru
      _
    // Predicated region
    $region26: #{tpu_custom_call.1} parent=1 // pred_check
      _
    $region27: #{tpu_custom_call.1} parent=1 // pred_check_branch
      %77 = sbr.rel (0) target = $region29
    $region28: #{tpu_custom_call.1} parent=1 // pred_region
      _
    $region29: #{tpu_custom_call.1} parent=1 // pred_fallthru
      _
    // Predicated region
    $region30: #{tpu_custom_call.1} parent=1 // pred_check
      _
    $region31: #{tpu_custom_call.1} parent=1 // pred_check_branch
      %79 = sbr.rel (0) target = $region33
    $region32: #{tpu_custom_call.1} parent=1 // pred_region
      _
    $region33: #{tpu_custom_call.1} parent=1 // pred_fallthru
      _
    // Predicated region
    $region34: #{tpu_custom_call.1} parent=1 // pred_check
      _
    $region35: #{tpu_custom_call.1} parent=1 // pred_check_branch
      %81 = sbr.rel (0) target = $region37
    $region36: #{tpu_custom_call.1} parent=1 // pred_region
      %s83 = ssub.s32 2048, 2048
      %84 = vsyncadd [#allocation9], %s83
      %s85 = sshll.u32 [#allocation10], 4
      %s86 = int_to_ptr.vmem [resolvable:$true] %s85
      %91 = dma.hbm_to_vmem [thread:$0]  %s8, 2048, %s86, [#allocation9], 128, 128, 8
    $region37: #{tpu_custom_call.1} parent=1 // pred_fallthru
      _
    // Predicated region
    $region38: #{tpu_custom_call.1} parent=1 // pred_check
      _
    $region39: #{tpu_custom_call.1} parent=1 // pred_check_branch
      %93 = sbr.rel (0) target = $region41
    $region40: #{tpu_custom_call.1} parent=1 // pred_region
      %s95 = ssub.s32 2048, 2048
      %96 = vsyncadd [#allocation12], %s95
      %s97 = sshll.u32 [#allocation11], 4
      %s98 = int_to_ptr.vmem [resolvable:$true] %s97
      %103 = dma.hbm_to_vmem [thread:$0]  %s9, 2048, %s98, [#allocation12], 128, 128, 8
    $region41: #{tpu_custom_call.1} parent=1 // pred_fallthru
      _
    // Predicated region
    $region42: #{tpu_custom_call.1} parent=1 // pred_check
      _
    $region43: #{tpu_custom_call.1} parent=1 // pred_check_branch
      %105 = sbr.rel (0) target = $region45
    $region44: #{tpu_custom_call.1} parent=1 // pred_region
      _
    $region45: #{tpu_custom_call.1} parent=1 // pred_fallthru
      _
    // Predicated region
    $region46: #{tpu_custom_call.1} parent=1 // pred_check
      _
    $region47: #{tpu_custom_call.1} parent=1 // pred_check_branch
      %107 = sbr.rel (0) target = $region49
    $region48: #{tpu_custom_call.1} parent=1 // pred_region
      %108 = dma.done [#allocation3], 512
    $region49: #{tpu_custom_call.1} parent=1 // pred_fallthru
      _
    // Predicated region
    $region50: #{tpu_custom_call.1} parent=1 // pred_check
      _
    $region51: #{tpu_custom_call.1} parent=1 // pred_check_branch
      %110 = sbr.rel (0) target = $region53
    $region52: #{tpu_custom_call.1} parent=1 // pred_region
      %111 = dma.done [#allocation6], 1536
    $region53: #{tpu_custom_call.1} parent=1 // pred_fallthru
      _
    // Predicated region
    $region54: #{tpu_custom_call.1} parent=1 // pred_check
      _
    $region55: #{tpu_custom_call.1} parent=1 // pred_check_branch
      %113 = sbr.rel (0) target = $region57
    $region56: #{tpu_custom_call.1} parent=1 // pred_region
      %114 = dma.done [#allocation6], 3072
    $region57: #{tpu_custom_call.1} parent=1 // pred_fallthru
      _
    // Predicated region
    $region58: #{tpu_custom_call.1} parent=1 // pred_check
      _
    $region59: #{tpu_custom_call.1} parent=1 // pred_check_branch
      %116 = sbr.rel (0) target = $region61
    $region60: #{tpu_custom_call.1} parent=1 // pred_region
      %117 = dma.done [#allocation9], 1536
    $region61: #{tpu_custom_call.1} parent=1 // pred_fallthru
      _
    // Predicated region
    $region62: #{tpu_custom_call.1} parent=1 // pred_check
      _
    $region63: #{tpu_custom_call.1} parent=1 // pred_check_branch
      %119 = sbr.rel (0) target = $region65
    $region64: #{tpu_custom_call.1} parent=1 // pred_region
      %120 = dma.done [#allocation9], 2048
    $region65: #{tpu_custom_call.1} parent=1 // pred_fallthru
      _
    // Predicated region
    $region66: #{tpu_custom_call.1} parent=1 // pred_check
      _
    $region67: #{tpu_custom_call.1} parent=1 // pred_check_branch
      %122 = sbr.rel (0) target = $region69
    $region68: #{tpu_custom_call.1} parent=1 // pred_region
      %123 = dma.done [#allocation12], 2048
    $region69: #{tpu_custom_call.1} parent=1 // pred_fallthru
      _
    %v125 = vld [vmem:[#allocation2] sm:$0xf]
    %v126 = vld [vmem:[#allocation2 + $0x4] sm:$0xf]
    %v127 = vld [vmem:[#allocation2 + $0x8] sm:$0xf]
    %v128 = vld [vmem:[#allocation2 + $0xc] sm:$0xf]
    %v129 = vld [vmem:[#allocation2 + $0x10] sm:$0xf]
    %v130 = vld [vmem:[#allocation2 + $0x14] sm:$0xf]
    %v131 = vld [vmem:[#allocation2 + $0x18] sm:$0xf]
    %v132 = vld [vmem:[#allocation2 + $0x1c] sm:$0xf]
    %v133 = vld [vmem:[#allocation5] sm:$0xff]
    %v134 = vld [vmem:[#allocation5 + $0x8] sm:$0xf]
    %v135 = vld [vmem:[#allocation5 + $0xc] sm:$0xff]
    %v136 = vld [vmem:[#allocation5 + $0x14] sm:$0xf]
    %v137 = vld [vmem:[#allocation5 + $0x18] sm:$0xff]
    %v138 = vld [vmem:[#allocation5 + $0x20] sm:$0xf]
    %v139 = vld [vmem:[#allocation5 + $0x24] sm:$0xff]
    %v140 = vld [vmem:[#allocation5 + $0x2c] sm:$0xf]
    %v141 = vld [vmem:[#allocation5 + $0x30] sm:$0xff]
    %v142 = vld [vmem:[#allocation5 + $0x38] sm:$0xf]
    %v143 = vld [vmem:[#allocation5 + $0x3c] sm:$0xff]
    %v144 = vld [vmem:[#allocation5 + $0x44] sm:$0xf]
    %v145 = vld [vmem:[#allocation5 + $0x48] sm:$0xff]
    %v146 = vld [vmem:[#allocation5 + $0x50] sm:$0xf]
    %v147 = vld [vmem:[#allocation5 + $0x54] sm:$0xff]
    %v148 = vld [vmem:[#allocation5 + $0x5c] sm:$0xf]
    %v149 = vld [vmem:[%s3] sm:$0x7]
    %v151 = vlaneseq
    %v152 = vshrl.u32 %v151, 7
    %v153 = vsub.s32 0, %v152
    %v154 = vrot.slane %v149, %v153
    %v155 = vlaneseq
    %v156 = vshrl.u32 %v155, 7
    %v157 = vsub.s32 1, %v156
    %v158 = vrot.slane %v149, %v157
    %v159 = vlaneseq
    %v160 = vshrl.u32 %v159, 7
    %v161 = vsub.s32 2, %v160
    %v162 = vrot.slane %v149, %v161
    %v174 = vunpack.c.l.b16 %v125
    %v175 = vunpack.c.l.b16 %v126
    %v176 = vunpack.c.l.b16 %v127
    %v177 = vunpack.c.l.b16 %v128
    %v178 = vunpack.c.l.b16 %v129
    %v179 = vunpack.c.l.b16 %v130
    %v180 = vunpack.c.l.b16 %v131
    %v181 = vunpack.c.l.b16 %v132
    %v182 = vpack.c.b16 %v175, %v174
    %v183 = vpack.c.b16 %v177, %v176
    %v184 = vpack.c.b16 %v179, %v178
    %v185 = vpack.c.b16 %v181, %v180
    %v202 = vunpack.c.l.b16 %v133
    %v203 = vunpack.c.h.b16 %v133
    %v204 = vunpack.c.l.b16 %v134
    %v205 = vunpack.c.l.b16 %v135
    %v206 = vunpack.c.h.b16 %v135
    %v207 = vunpack.c.l.b16 %v136
    %v208 = vunpack.c.l.b16 %v137
    %v209 = vunpack.c.h.b16 %v137
    %v210 = vunpack.c.l.b16 %v138
    %v211 = vunpack.c.l.b16 %v139
    %v212 = vunpack.c.h.b16 %v139
    %v213 = vunpack.c.l.b16 %v140
    %v214 = vunpack.c.l.b16 %v141
    %v215 = vunpack.c.h.b16 %v141
    %v216 = vunpack.c.l.b16 %v142
    %v217 = vunpack.c.l.b16 %v143
    %v218 = vunpack.c.h.b16 %v143
    %v219 = vunpack.c.l.b16 %v144
    %v220 = vunpack.c.l.b16 %v145
    %v221 = vunpack.c.h.b16 %v145
    %v222 = vunpack.c.l.b16 %v146
    %v223 = vunpack.c.l.b16 %v147
    %v224 = vunpack.c.h.b16 %v147
    %v225 = vunpack.c.l.b16 %v148
    %v226 = vpack.c.b16 %v205, %v202
    %v227 = vpack.c.b16 %v206, %v203
    %v228 = vpack.c.b16 %v207, %v204
    %v229 = vpack.c.b16 %v211, %v208
    %v230 = vpack.c.b16 %v212, %v209
    %v231 = vpack.c.b16 %v213, %v210
    %v232 = vpack.c.b16 %v217, %v214
    %v233 = vpack.c.b16 %v218, %v215
    %v234 = vpack.c.b16 %v219, %v216
    %v235 = vpack.c.b16 %v223, %v220
    %v236 = vpack.c.b16 %v224, %v221
    %v237 = vpack.c.b16 %v225, %v222
    %vm250 = vcmask 523264
    %v252 = vsel %vm250, %v182, 0
    %v255 = vsel %vm250, %v183, 0
    %v258 = vsel %vm250, %v184, 0
    %v261 = vsel %vm250, %v185, 0
    %263 = vmatprep.subr.bf16.mxu0 0
    %264 = vmatpush1.bf16.msra.mxu0 0
    %265 = vmatprep.subr.bf16.mxu0 0
    %266 = vmatpush1.bf16.msra.mxu0 0
    %267 = vmatprep.subr.bf16.mxu0 0
    %268 = vmatpush1.bf16.msra.mxu0 0
    %269 = vmatprep.subr.bf16.mxu0 0
    %270 = vmatpush1.bf16.msra.mxu0 0
    %271 = vmatprep.subr.bf16.mxu0 %v236
    %272 = vmatpush1.bf16.msra.mxu0 %v235
    %273 = vmatprep.subr.bf16.mxu0 %v233
    %274 = vmatpush1.bf16.msra.mxu0 %v232
    %275 = vmatprep.subr.bf16.mxu0 %v230
    %276 = vmatpush1.bf16.msra.mxu0 %v229
    %277 = vmatprep.subr.bf16.mxu0 %v227
    %278 = vmatpush1.bf16.msra.mxu0 %v226
    %279 = vmatprep.subr.bf16.mxu0 0
    %280 = vmatpush2.bf16.msra.mxu0 0
    %281 = vmatprep.subr.bf16.mxu0 0
    %282 = vmatpush2.bf16.msra.mxu0 0
    %283 = vmatprep.subr.bf16.mxu0 0
    %284 = vmatpush2.bf16.msra.mxu0 0
    %285 = vmatprep.subr.bf16.mxu0 0
    %286 = vmatpush2.bf16.msra.mxu0 0
    %287 = vmatprep.subr.bf16.mxu0 0
    %288 = vmatpush2.bf16.msra.mxu0 0
    %289 = vmatprep.subr.bf16.mxu0 0
    %290 = vmatpush2.bf16.msra.mxu0 0
    %291 = vmatprep.subr.bf16.mxu0 0
    %292 = vmatpush2.bf16.msra.mxu0 0
    %293 = vmatprep.subr.bf16.mxu0 0
    %294 = vmatpush2.bf16.msra.mxu0 0
    %295 = vmatprep.mubr.bf16.mxu0 0
    %296 = vmatmul.mubr.bf16.gmra.mxu0 %v252
    %v297 = vpop.f32.mrf.mxu0
    %v298 = vadd.f32 %v154, %v297
    %v299 = vpop.f32.mrf.mxu0
    %v300 = vadd.f32 %v158, %v299
    %v301 = vpop.f32.mrf.mxu0
    %v302 = vadd.f32 %v154, %v301
    %v303 = vpop.f32.mrf.mxu0
    %v304 = vadd.f32 %v158, %v303
    %305 = vmatprep.mubr.bf16.mxu0 0
    %306 = vmatmul.mubr.bf16.gmra.mxu0 %v255
    %v307 = vpop.f32.mrf.mxu0
    %v308 = vadd.f32 %v154, %v307
    %v309 = vpop.f32.mrf.mxu0
    %v310 = vadd.f32 %v158, %v309
    %v311 = vpop.f32.mrf.mxu0
    %v312 = vadd.f32 %v154, %v311
    %v313 = vpop.f32.mrf.mxu0
    %v314 = vadd.f32 %v158, %v313
    %315 = vmatprep.mubr.bf16.mxu0 0
    %316 = vmatmul.mubr.bf16.gmra.mxu0 %v258
    %v317 = vpop.f32.mrf.mxu0
    %v318 = vadd.f32 %v154, %v317
    %v319 = vpop.f32.mrf.mxu0
    %v320 = vadd.f32 %v158, %v319
    %v321 = vpop.f32.mrf.mxu0
    %v322 = vadd.f32 %v154, %v321
    %v323 = vpop.f32.mrf.mxu0
    %v324 = vadd.f32 %v158, %v323
    %325 = vmatprep.mubr.bf16.mxu0 0
    %326 = vmatmul.mubr.bf16.gmra.mxu0 %v261
    %v327 = vpop.f32.mrf.mxu0
    %v328 = vadd.f32 %v154, %v327
    %v329 = vpop.f32.mrf.mxu0
    %v330 = vadd.f32 %v158, %v329
    %v331 = vpop.f32.mrf.mxu0
    %v332 = vadd.f32 %v154, %v331
    %v333 = vpop.f32.mrf.mxu0
    %v334 = vadd.f32 %v158, %v333
    %335 = vdwg.mxu0
    %336 = vmatprep.subr.bf16.mxu0 0
    %337 = vmatpush1.bf16.msra.mxu0 0
    %338 = vmatprep.subr.bf16.mxu0 0
    %339 = vmatpush1.bf16.msra.mxu0 0
    %340 = vmatprep.subr.bf16.mxu0 0
    %341 = vmatpush1.bf16.msra.mxu0 0
    %342 = vmatprep.subr.bf16.mxu0 0
    %343 = vmatpush1.bf16.msra.mxu0 0
    %344 = vmatprep.subr.bf16.mxu0 0
    %345 = vmatpush1.bf16.msra.mxu0 %v237
    %346 = vmatprep.subr.bf16.mxu0 0
    %347 = vmatpush1.bf16.msra.mxu0 %v234
    %348 = vmatprep.subr.bf16.mxu0 0
    %349 = vmatpush1.bf16.msra.mxu0 %v231
    %350 = vmatprep.subr.bf16.mxu0 0
    %351 = vmatpush1.bf16.msra.mxu0 %v228
    %352 = vmatprep.subr.bf16.mxu0 0
    %353 = vmatpush2.bf16.msra.mxu0 0
    %354 = vmatprep.subr.bf16.mxu0 0
    %355 = vmatpush2.bf16.msra.mxu0 0
    %356 = vmatprep.subr.bf16.mxu0 0
    %357 = vmatpush2.bf16.msra.mxu0 0
    %358 = vmatprep.subr.bf16.mxu0 0
    %359 = vmatpush2.bf16.msra.mxu0 0
    %360 = vmatprep.subr.bf16.mxu0 0
    %361 = vmatpush2.bf16.msra.mxu0 0
    %362 = vmatprep.subr.bf16.mxu0 0
    %363 = vmatpush2.bf16.msra.mxu0 0
    %364 = vmatprep.subr.bf16.mxu0 0
    %365 = vmatpush2.bf16.msra.mxu0 0
    %366 = vmatprep.subr.bf16.mxu0 0
    %367 = vmatpush2.bf16.msra.mxu0 0
    %368 = vmatprep.mubr.bf16.mxu0 0
    %369 = vmatmul.mubr.bf16.gmra.mxu0 %v252
    %v370 = vpop.f32.mrf.mxu0
    %v371 = vadd.f32 %v162, %v370
    %v372 = vpop.f32.mrf.mxu0
    %v373 = vpop.f32.mrf.mxu0
    %v374 = vadd.f32 %v162, %v373
    %v375 = vpop.f32.mrf.mxu0
    %376 = vmatprep.mubr.bf16.mxu0 0
    %377 = vmatmul.mubr.bf16.gmra.mxu0 %v255
    %v378 = vpop.f32.mrf.mxu0
    %v379 = vadd.f32 %v162, %v378
    %v380 = vpop.f32.mrf.mxu0
    %v381 = vpop.f32.mrf.mxu0
    %v382 = vadd.f32 %v162, %v381
    %v383 = vpop.f32.mrf.mxu0
    %384 = vmatprep.mubr.bf16.mxu0 0
    %385 = vmatmul.mubr.bf16.gmra.mxu0 %v258
    %v386 = vpop.f32.mrf.mxu0
    %v387 = vadd.f32 %v162, %v386
    %v388 = vpop.f32.mrf.mxu0
    %v389 = vpop.f32.mrf.mxu0
    %v390 = vadd.f32 %v162, %v389
    %v391 = vpop.f32.mrf.mxu0
    %392 = vmatprep.mubr.bf16.mxu0 0
    %393 = vmatmul.mubr.bf16.gmra.mxu0 %v261
    %v394 = vpop.f32.mrf.mxu0
    %v395 = vadd.f32 %v162, %v394
    %v396 = vpop.f32.mrf.mxu0
    %v397 = vpop.f32.mrf.mxu0
    %v398 = vadd.f32 %v162, %v397
    %v399 = vpop.f32.mrf.mxu0
    %400 = vdwg.mxu0
    %v401 = vld [vmem:[#allocation8] sm:$0xff]
    %v402 = vld [vmem:[#allocation8 + $0x8] sm:$0xf]
    %v403 = vld [vmem:[#allocation8 + $0xc] sm:$0xff]
    %v404 = vld [vmem:[#allocation8 + $0x14] sm:$0xf]
    %v405 = vld [vmem:[#allocation8 + $0x18] sm:$0xff]
    %v406 = vld [vmem:[#allocation8 + $0x20] sm:$0xf]
    %v407 = vld [vmem:[#allocation8 + $0x24] sm:$0xff]
    %v408 = vld [vmem:[#allocation8 + $0x2c] sm:$0xf]
    %v409 = vld [vmem:[#allocation8 + $0x30] sm:$0xff]
    %v410 = vld [vmem:[#allocation8 + $0x38] sm:$0xf]
    %v411 = vld [vmem:[#allocation8 + $0x3c] sm:$0xff]
    %v412 = vld [vmem:[#allocation8 + $0x44] sm:$0xf]
    %v413 = vld [vmem:[#allocation8 + $0x48] sm:$0xff]
    %v414 = vld [vmem:[#allocation8 + $0x50] sm:$0xf]
    %v415 = vld [vmem:[#allocation8 + $0x54] sm:$0xff]
    %v416 = vld [vmem:[#allocation8 + $0x5c] sm:$0xf]
    %v417 = vld [vmem:[%s6] sm:$0x7]
    %v419 = vlaneseq
    %v420 = vshrl.u32 %v419, 7
    %v421 = vsub.s32 0, %v420
    %v422 = vrot.slane %v417, %v421
    %v423 = vlaneseq
    %v424 = vshrl.u32 %v423, 7
    %v425 = vsub.s32 1, %v424
    %v426 = vrot.slane %v417, %v425
    %v427 = vlaneseq
    %v428 = vshrl.u32 %v427, 7
    %v429 = vsub.s32 2, %v428
    %v430 = vrot.slane %v417, %v429
    %v450 = vunpack.c.l.b16 %v401
    %v451 = vunpack.c.h.b16 %v401
    %v452 = vunpack.c.l.b16 %v402
    %v453 = vunpack.c.l.b16 %v403
    %v454 = vunpack.c.h.b16 %v403
    %v455 = vunpack.c.l.b16 %v404
    %v456 = vunpack.c.l.b16 %v405
    %v457 = vunpack.c.h.b16 %v405
    %v458 = vunpack.c.l.b16 %v406
    %v459 = vunpack.c.l.b16 %v407
    %v460 = vunpack.c.h.b16 %v407
    %v461 = vunpack.c.l.b16 %v408
    %v462 = vunpack.c.l.b16 %v409
    %v463 = vunpack.c.h.b16 %v409
    %v464 = vunpack.c.l.b16 %v410
    %v465 = vunpack.c.l.b16 %v411
    %v466 = vunpack.c.h.b16 %v411
    %v467 = vunpack.c.l.b16 %v412
    %v468 = vunpack.c.l.b16 %v413
    %v469 = vunpack.c.h.b16 %v413
    %v470 = vunpack.c.l.b16 %v414
    %v471 = vunpack.c.l.b16 %v415
    %v472 = vunpack.c.h.b16 %v415
    %v473 = vunpack.c.l.b16 %v416
    %v474 = vpack.c.b16 %v453, %v450
    %v475 = vpack.c.b16 %v454, %v451
    %v476 = vpack.c.b16 %v455, %v452
    %v477 = vpack.c.b16 %v459, %v456
    %v478 = vpack.c.b16 %v460, %v457
    %v479 = vpack.c.b16 %v461, %v458
    %v480 = vpack.c.b16 %v465, %v462
    %v481 = vpack.c.b16 %v466, %v463
    %v482 = vpack.c.b16 %v467, %v464
    %v483 = vpack.c.b16 %v471, %v468
    %v484 = vpack.c.b16 %v472, %v469
    %v485 = vpack.c.b16 %v473, %v470
    %v499 = vsel %vm250, %v132, 0
    %501 = vmatprep.subr.bf16.mxu0 0
    %502 = vmatpush1.bf16.msra.mxu0 0
    %503 = vmatprep.subr.bf16.mxu0 0
    %504 = vmatpush1.bf16.msra.mxu0 0
    %505 = vmatprep.subr.bf16.mxu0 0
    %506 = vmatpush1.bf16.msra.mxu0 0
    %507 = vmatprep.subr.bf16.mxu0 0
    %508 = vmatpush1.bf16.msra.mxu0 0
    %509 = vmatprep.subr.bf16.mxu0 %v484
    %510 = vmatpush1.bf16.msra.mxu0 %v483
    %511 = vmatprep.subr.bf16.mxu0 %v481
    %512 = vmatpush1.bf16.msra.mxu0 %v480
    %513 = vmatprep.subr.bf16.mxu0 %v478
    %514 = vmatpush1.bf16.msra.mxu0 %v477
    %515 = vmatprep.subr.bf16.mxu0 %v475
    %516 = vmatpush1.bf16.msra.mxu0 %v474
    %517 = vmatprep.subr.bf16.mxu0 0
    %518 = vmatpush2.bf16.msra.mxu0 0
    %519 = vmatprep.subr.bf16.mxu0 0
    %520 = vmatpush2.bf16.msra.mxu0 0
    %521 = vmatprep.subr.bf16.mxu0 0
    %522 = vmatpush2.bf16.msra.mxu0 0
    %523 = vmatprep.subr.bf16.mxu0 0
    %524 = vmatpush2.bf16.msra.mxu0 0
    %525 = vmatprep.subr.bf16.mxu0 0
    %526 = vmatpush2.bf16.msra.mxu0 0
    %527 = vmatprep.subr.bf16.mxu0 0
    %528 = vmatpush2.bf16.msra.mxu0 0
    %529 = vmatprep.subr.bf16.mxu0 0
    %530 = vmatpush2.bf16.msra.mxu0 0
    %531 = vmatprep.subr.bf16.mxu0 0
    %532 = vmatpush2.bf16.msra.mxu0 0
    %533 = vmatprep.mubr.bf16.mxu0 0
    %534 = vmatmul.mubr.bf16.gmra.mxu0 %v499
    %v535 = vpop.f32.mrf.mxu0
    %v536 = vadd.f32 %v422, %v535
    %v537 = vpop.f32.mrf.mxu0
    %v538 = vadd.f32 %v426, %v537
    %v539 = vpop.f32.mrf.mxu0
    %v540 = vpop.f32.mrf.mxu0
    %541 = vdwg.mxu0
    %542 = vmatprep.subr.bf16.mxu0 0
    %543 = vmatpush1.bf16.msra.mxu0 0
    %544 = vmatprep.subr.bf16.mxu0 0
    %545 = vmatpush1.bf16.msra.mxu0 0
    %546 = vmatprep.subr.bf16.mxu0 0
    %547 = vmatpush1.bf16.msra.mxu0 0
    %548 = vmatprep.subr.bf16.mxu0 0
    %549 = vmatpush1.bf16.msra.mxu0 0
    %550 = vmatprep.subr.bf16.mxu0 0
    %551 = vmatpush1.bf16.msra.mxu0 %v485
    %552 = vmatprep.subr.bf16.mxu0 0
    %553 = vmatpush1.bf16.msra.mxu0 %v482
    %554 = vmatprep.subr.bf16.mxu0 0
    %555 = vmatpush1.bf16.msra.mxu0 %v479
    %556 = vmatprep.subr.bf16.mxu0 0
    %557 = vmatpush1.bf16.msra.mxu0 %v476
    %558 = vmatprep.subr.bf16.mxu0 0
    %559 = vmatpush2.bf16.msra.mxu0 0
    %560 = vmatprep.subr.bf16.mxu0 0
    %561 = vmatpush2.bf16.msra.mxu0 0
    %562 = vmatprep.subr.bf16.mxu0 0
    %563 = vmatpush2.bf16.msra.mxu0 0
    %564 = vmatprep.subr.bf16.mxu0 0
    %565 = vmatpush2.bf16.msra.mxu0 0
    %566 = vmatprep.subr.bf16.mxu0 0
    %567 = vmatpush2.bf16.msra.mxu0 0
    %568 = vmatprep.subr.bf16.mxu0 0
    %569 = vmatpush2.bf16.msra.mxu0 0
    %570 = vmatprep.subr.bf16.mxu0 0
    %571 = vmatpush2.bf16.msra.mxu0 0
    %572 = vmatprep.subr.bf16.mxu0 0
    %573 = vmatpush2.bf16.msra.mxu0 0
    %574 = vmatprep.mubr.bf16.mxu0 0
    %575 = vmatmul.mubr.bf16.gmra.mxu0 %v499
    %v576 = vpop.f32.mrf.mxu0
    %v577 = vadd.f32 %v430, %v576
    %v578 = vpop.f32.mrf.mxu0
    %v579 = vpop.f32.mrf.mxu0
    %v580 = vpop.f32.mrf.mxu0
    %581 = vdwg.mxu0
    %v582 = vxor.u32 %v536, 2147483648
    %v583 = vmul.f32 %v582, 1.442695
    %v584 = vpow.pop %v583
    %v585 = vadd.f32 %v584, 1.0
    %v586 = vrcp.pop %v585
    %v587 = vmul.f32 1.0, %v586
    %v588 = vxor.u32 %v538, 2147483648
    %v589 = vmul.f32 %v588, 1.442695
    %v590 = vpow.pop %v589
    %v591 = vadd.f32 %v590, 1.0
    %v592 = vrcp.pop %v591
    %v593 = vmul.f32 1.0, %v592
    %v594 = vld [vmem:[%s7] sm:$0x1]
    %v596 = vlaneseq
    %v597 = vshrl.u32 %v596, 7
    %v598 = vsub.s32 0, %v597
    %v599 = vrot.slane %v594, %v598
    %v601 = vmul.f32 %v587, %v599
    %v602 = vadd.f32 %v577, %v601
    %v603 = vtanh.pop %v602
    %v604 = vsub.f32 1.0, %v593
    %v605 = vmul.f32 %v604, %v603
    %v606 = vld [vmem:[#allocation7] sm:$0xff]
    %v607 = vld [vmem:[#allocation7 + $0x8] sm:$0xf]
    %v608 = vld [vmem:[#allocation7 + $0xc] sm:$0xff]
    %v609 = vld [vmem:[#allocation7 + $0x14] sm:$0xf]
    %v610 = vld [vmem:[#allocation7 + $0x18] sm:$0xff]
    %v611 = vld [vmem:[#allocation7 + $0x20] sm:$0xf]
    %v612 = vld [vmem:[#allocation7 + $0x24] sm:$0xff]
    %v613 = vld [vmem:[#allocation7 + $0x2c] sm:$0xf]
    %v614 = vld [vmem:[#allocation7 + $0x30] sm:$0xff]
    %v615 = vld [vmem:[#allocation7 + $0x38] sm:$0xf]
    %v616 = vld [vmem:[#allocation7 + $0x3c] sm:$0xff]
    %v617 = vld [vmem:[#allocation7 + $0x44] sm:$0xf]
    %v618 = vld [vmem:[#allocation7 + $0x48] sm:$0xff]
    %v619 = vld [vmem:[#allocation7 + $0x50] sm:$0xf]
    %v620 = vld [vmem:[#allocation7 + $0x54] sm:$0xff]
    %v621 = vld [vmem:[#allocation7 + $0x5c] sm:$0xf]
    %v622 = vld [vmem:[#allocation7 + $0x60] sm:$0xff]
    %v623 = vld [vmem:[#allocation7 + $0x68] sm:$0xf]
    %v624 = vld [vmem:[#allocation7 + $0x6c] sm:$0xff]
    %v625 = vld [vmem:[#allocation7 + $0x74] sm:$0xf]
    %v626 = vld [vmem:[#allocation7 + $0x78] sm:$0xff]
    %v627 = vld [vmem:[#allocation7 + $0x80] sm:$0xf]
    %v628 = vld [vmem:[#allocation7 + $0x84] sm:$0xff]
    %v629 = vld [vmem:[#allocation7 + $0x8c] sm:$0xf]
    %v630 = vld [vmem:[#allocation7 + $0x90] sm:$0xff]
    %v631 = vld [vmem:[#allocation7 + $0x98] sm:$0xf]
    %v632 = vld [vmem:[#allocation7 + $0x9c] sm:$0xff]
    %v633 = vld [vmem:[#allocation7 + $0xa4] sm:$0xf]
    %v634 = vld [vmem:[#allocation7 + $0xa8] sm:$0xff]
    %v635 = vld [vmem:[#allocation7 + $0xb0] sm:$0xf]
    %v636 = vld [vmem:[#allocation7 + $0xb4] sm:$0xff]
    %v637 = vld [vmem:[#allocation7 + $0xbc] sm:$0xf]
    %v638 = vld [vmem:[%s4] sm:$0x1]
    %v640 = vlaneseq
    %v641 = vshrl.u32 %v640, 7
    %v642 = vsub.s32 0, %v641
    %v643 = vrot.slane %v638, %v642
    %v677 = vunpack.c.l.b16 %v606
    %v678 = vunpack.c.h.b16 %v606
    %v679 = vunpack.c.l.b16 %v607
    %v680 = vunpack.c.l.b16 %v608
    %v681 = vunpack.c.h.b16 %v608
    %v682 = vunpack.c.l.b16 %v609
    %v683 = vunpack.c.l.b16 %v610
    %v684 = vunpack.c.h.b16 %v610
    %v685 = vunpack.c.l.b16 %v611
    %v686 = vunpack.c.l.b16 %v612
    %v687 = vunpack.c.h.b16 %v612
    %v688 = vunpack.c.l.b16 %v613
    %v689 = vunpack.c.l.b16 %v614
    %v690 = vunpack.c.h.b16 %v614
    %v691 = vunpack.c.l.b16 %v615
    %v692 = vunpack.c.l.b16 %v616
    %v693 = vunpack.c.h.b16 %v616
    %v694 = vunpack.c.l.b16 %v617
    %v695 = vunpack.c.l.b16 %v618
    %v696 = vunpack.c.h.b16 %v618
    %v697 = vunpack.c.l.b16 %v619
    %v698 = vunpack.c.l.b16 %v620
    %v699 = vunpack.c.h.b16 %v620
    %v700 = vunpack.c.l.b16 %v621
    %v701 = vunpack.c.l.b16 %v622
    %v702 = vunpack.c.h.b16 %v622
    %v703 = vunpack.c.l.b16 %v623
    %v704 = vunpack.c.l.b16 %v624
    %v705 = vunpack.c.h.b16 %v624
    %v706 = vunpack.c.l.b16 %v625
    %v707 = vunpack.c.l.b16 %v626
    %v708 = vunpack.c.h.b16 %v626
    %v709 = vunpack.c.l.b16 %v627
    %v710 = vunpack.c.l.b16 %v628
    %v711 = vunpack.c.h.b16 %v628
    %v712 = vunpack.c.l.b16 %v629
    %v713 = vunpack.c.l.b16 %v630
    %v714 = vunpack.c.h.b16 %v630
    %v715 = vunpack.c.l.b16 %v631
    %v716 = vunpack.c.l.b16 %v632
    %v717 = vunpack.c.h.b16 %v632
    %v718 = vunpack.c.l.b16 %v633
    %v719 = vunpack.c.l.b16 %v634
    %v720 = vunpack.c.h.b16 %v634
    %v721 = vunpack.c.l.b16 %v635
    %v722 = vunpack.c.l.b16 %v636
    %v723 = vunpack.c.h.b16 %v636
    %v724 = vunpack.c.l.b16 %v637
    %v725 = vpack.c.b16 %v680, %v677
    %v726 = vpack.c.b16 %v681, %v678
    %v727 = vpack.c.b16 %v682, %v679
    %v728 = vpack.c.b16 %v686, %v683
    %v729 = vpack.c.b16 %v687, %v684
    %v730 = vpack.c.b16 %v688, %v685
    %v731 = vpack.c.b16 %v692, %v689
    %v732 = vpack.c.b16 %v693, %v690
    %v733 = vpack.c.b16 %v694, %v691
    %v734 = vpack.c.b16 %v698, %v695
    %v735 = vpack.c.b16 %v699, %v696
    %v736 = vpack.c.b16 %v700, %v697
    %v737 = vpack.c.b16 %v704, %v701
    %v738 = vpack.c.b16 %v705, %v702
    %v739 = vpack.c.b16 %v706, %v703
    %v740 = vpack.c.b16 %v710, %v707
    %v741 = vpack.c.b16 %v711, %v708
    %v742 = vpack.c.b16 %v712, %v709
    %v743 = vpack.c.b16 %v716, %v713
    %v744 = vpack.c.b16 %v717, %v714
    %v745 = vpack.c.b16 %v718, %v715
    %v746 = vpack.c.b16 %v722, %v719
    %v747 = vpack.c.b16 %v723, %v720
    %v748 = vpack.c.b16 %v724, %v721
    %773 = vmatprep.subr.bf16.mxu0 %v747
    %774 = vmatpush1.bf16.msra.mxu0 %v746
    %775 = vmatprep.subr.bf16.mxu0 %v744
    %776 = vmatpush1.bf16.msra.mxu0 %v743
    %777 = vmatprep.subr.bf16.mxu0 %v741
    %778 = vmatpush1.bf16.msra.mxu0 %v740
    %779 = vmatprep.subr.bf16.mxu0 %v738
    %780 = vmatpush1.bf16.msra.mxu0 %v737
    %781 = vmatprep.subr.bf16.mxu0 %v735
    %782 = vmatpush1.bf16.msra.mxu0 %v734
    %783 = vmatprep.subr.bf16.mxu0 %v732
    %784 = vmatpush1.bf16.msra.mxu0 %v731
    %785 = vmatprep.subr.bf16.mxu0 %v729
    %786 = vmatpush1.bf16.msra.mxu0 %v728
    %787 = vmatprep.subr.bf16.mxu0 %v726
    %788 = vmatpush1.bf16.msra.mxu0 %v725
    %789 = vmatprep.subr.bf16.mxu0 0
    %790 = vmatpush2.bf16.msra.mxu0 0
    %791 = vmatprep.subr.bf16.mxu0 0
    %792 = vmatpush2.bf16.msra.mxu0 0
    %793 = vmatprep.subr.bf16.mxu0 0
    %794 = vmatpush2.bf16.msra.mxu0 0
    %795 = vmatprep.subr.bf16.mxu0 0
    %796 = vmatpush2.bf16.msra.mxu0 0
    %797 = vmatprep.subr.bf16.mxu0 0
    %798 = vmatpush2.bf16.msra.mxu0 0
    %799 = vmatprep.subr.bf16.mxu0 0
    %800 = vmatpush2.bf16.msra.mxu0 0
    %801 = vmatprep.subr.bf16.mxu0 0
    %802 = vmatpush2.bf16.msra.mxu0 0
    %803 = vmatprep.subr.bf16.mxu0 0
    %804 = vmatpush2.bf16.msra.mxu0 0
    %805 = vmatprep.mubr.bf16.mxu0 0
    %806 = vmatmul.mubr.bf16.gmra.mxu0 0
    %v807 = vpop.f32.mrf.mxu0
    %v808 = vadd.f32 0.0, %v807
    %v809 = vpop.f32.mrf.mxu0
    %v810 = vadd.f32 0.0, %v809
    %v811 = vpop.f32.mrf.mxu0
    %v812 = vpop.f32.mrf.mxu0
    %813 = vdwg.mxu0
    %814 = vmatprep.subr.bf16.mxu0 0
    %815 = vmatpush1.bf16.msra.mxu0 %v748
    %816 = vmatprep.subr.bf16.mxu0 0
    %817 = vmatpush1.bf16.msra.mxu0 %v745
    %818 = vmatprep.subr.bf16.mxu0 0
    %819 = vmatpush1.bf16.msra.mxu0 %v742
    %820 = vmatprep.subr.bf16.mxu0 0
    %821 = vmatpush1.bf16.msra.mxu0 %v739
    %822 = vmatprep.subr.bf16.mxu0 0
    %823 = vmatpush1.bf16.msra.mxu0 %v736
    %824 = vmatprep.subr.bf16.mxu0 0
    %825 = vmatpush1.bf16.msra.mxu0 %v733
    %826 = vmatprep.subr.bf16.mxu0 0
    %827 = vmatpush1.bf16.msra.mxu0 %v730
    %828 = vmatprep.subr.bf16.mxu0 0
    %829 = vmatpush1.bf16.msra.mxu0 %v727
    %830 = vmatprep.subr.bf16.mxu0 0
    %831 = vmatpush2.bf16.msra.mxu0 0
    %832 = vmatprep.subr.bf16.mxu0 0
    %833 = vmatpush2.bf16.msra.mxu0 0
    %834 = vmatprep.subr.bf16.mxu0 0
    %835 = vmatpush2.bf16.msra.mxu0 0
    %836 = vmatprep.subr.bf16.mxu0 0
    %837 = vmatpush2.bf16.msra.mxu0 0
    %838 = vmatprep.subr.bf16.mxu0 0
    %839 = vmatpush2.bf16.msra.mxu0 0
    %840 = vmatprep.subr.bf16.mxu0 0
    %841 = vmatpush2.bf16.msra.mxu0 0
    %842 = vmatprep.subr.bf16.mxu0 0
    %843 = vmatpush2.bf16.msra.mxu0 0
    %844 = vmatprep.subr.bf16.mxu0 0
    %845 = vmatpush2.bf16.msra.mxu0 0
    %846 = vmatprep.mubr.bf16.mxu0 0
    %847 = vmatmul.mubr.bf16.gmra.mxu0 0
    %v848 = vpop.f32.mrf.mxu0
    %v849 = vadd.f32 0.0, %v848
    %v850 = vpop.f32.mrf.mxu0
    %v851 = vpop.f32.mrf.mxu0
    %v852 = vpop.f32.mrf.mxu0
    %853 = vdwg.mxu0
    %v854 = vadd.f32 %v298, %v808
    %v855 = vxor.u32 %v854, 2147483648
    %v856 = vmul.f32 %v855, 1.442695
    %v857 = vpow.pop %v856
    %v858 = vadd.f32 %v857, 1.0
    %v859 = vrcp.pop %v858
    %v860 = vmul.f32 1.0, %v859
    %v861 = vadd.f32 %v300, %v810
    %v862 = vxor.u32 %v861, 2147483648
    %v863 = vmul.f32 %v862, 1.442695
    %v864 = vpow.pop %v863
    %v865 = vadd.f32 %v864, 1.0
    %v866 = vrcp.pop %v865
    %v867 = vmul.f32 1.0, %v866
    %v868 = vadd.f32 %v849, %v643
    %v869 = vmul.f32 %v860, %v868
    %v870 = vadd.f32 %v371, %v869
    %v871 = vtanh.pop %v870
    %v872 = vsub.f32 1.0, %v867
    %v873 = vmul.f32 %v872, %v871
    %v874 = vmul.f32 %v867, 0.0
    %v875 = vadd.f32 %v873, %v874
    %v876 = vpack.c.bf16 %v875, %v875
    %877 = vmatprep.subr.bf16.mxu0 %v747
    %878 = vmatpush1.bf16.msra.mxu0 %v746
    %879 = vmatprep.subr.bf16.mxu0 %v744
    %880 = vmatpush1.bf16.msra.mxu0 %v743
    %881 = vmatprep.subr.bf16.mxu0 %v741
    %882 = vmatpush1.bf16.msra.mxu0 %v740
    %883 = vmatprep.subr.bf16.mxu0 %v738
    %884 = vmatpush1.bf16.msra.mxu0 %v737
    %885 = vmatprep.subr.bf16.mxu0 %v735
    %886 = vmatpush1.bf16.msra.mxu0 %v734
    %887 = vmatprep.subr.bf16.mxu0 %v732
    %888 = vmatpush1.bf16.msra.mxu0 %v731
    %889 = vmatprep.subr.bf16.mxu0 %v729
    %890 = vmatpush1.bf16.msra.mxu0 %v728
    %891 = vmatprep.subr.bf16.mxu0 %v726
    %892 = vmatpush1.bf16.msra.mxu0 %v725
    %893 = vmatprep.subr.bf16.mxu0 0
    %894 = vmatpush2.bf16.msra.mxu0 0
    %895 = vmatprep.subr.bf16.mxu0 0
    %896 = vmatpush2.bf16.msra.mxu0 0
    %897 = vmatprep.subr.bf16.mxu0 0
    %898 = vmatpush2.bf16.msra.mxu0 0
    %899 = vmatprep.subr.bf16.mxu0 0
    %900 = vmatpush2.bf16.msra.mxu0 0
    %901 = vmatprep.subr.bf16.mxu0 0
    %902 = vmatpush2.bf16.msra.mxu0 0
    %903 = vmatprep.subr.bf16.mxu0 0
    %904 = vmatpush2.bf16.msra.mxu0 0
    %905 = vmatprep.subr.bf16.mxu0 0
    %906 = vmatpush2.bf16.msra.mxu0 0
    %907 = vmatprep.subr.bf16.mxu0 0
    %908 = vmatpush2.bf16.msra.mxu0 0
    %909 = vmatprep.mubr.bf16.mxu0 0
    %910 = vmatmul.mubr.bf16.gmra.mxu0 %v876
    %v911 = vpop.f32.mrf.mxu0
    %v912 = vadd.f32 0.0, %v911
    %v913 = vpop.f32.mrf.mxu0
    %v914 = vadd.f32 0.0, %v913
    %v915 = vpop.f32.mrf.mxu0
    %v916 = vpop.f32.mrf.mxu0
    %917 = vdwg.mxu0
    %918 = vmatprep.subr.bf16.mxu0 0
    %919 = vmatpush1.bf16.msra.mxu0 %v748
    %920 = vmatprep.subr.bf16.mxu0 0
    %921 = vmatpush1.bf16.msra.mxu0 %v745
    %922 = vmatprep.subr.bf16.mxu0 0
    %923 = vmatpush1.bf16.msra.mxu0 %v742
    %924 = vmatprep.subr.bf16.mxu0 0
    %925 = vmatpush1.bf16.msra.mxu0 %v739
    %926 = vmatprep.subr.bf16.mxu0 0
    %927 = vmatpush1.bf16.msra.mxu0 %v736
    %928 = vmatprep.subr.bf16.mxu0 0
    %929 = vmatpush1.bf16.msra.mxu0 %v733
    %930 = vmatprep.subr.bf16.mxu0 0
    %931 = vmatpush1.bf16.msra.mxu0 %v730
    %932 = vmatprep.subr.bf16.mxu0 0
    %933 = vmatpush1.bf16.msra.mxu0 %v727
    %934 = vmatprep.subr.bf16.mxu0 0
    %935 = vmatpush2.bf16.msra.mxu0 0
    %936 = vmatprep.subr.bf16.mxu0 0
    %937 = vmatpush2.bf16.msra.mxu0 0
    %938 = vmatprep.subr.bf16.mxu0 0
    %939 = vmatpush2.bf16.msra.mxu0 0
    %940 = vmatprep.subr.bf16.mxu0 0
    %941 = vmatpush2.bf16.msra.mxu0 0
    %942 = vmatprep.subr.bf16.mxu0 0
    %943 = vmatpush2.bf16.msra.mxu0 0
    %944 = vmatprep.subr.bf16.mxu0 0
    %945 = vmatpush2.bf16.msra.mxu0 0
    %946 = vmatprep.subr.bf16.mxu0 0
    %947 = vmatpush2.bf16.msra.mxu0 0
    %948 = vmatprep.subr.bf16.mxu0 0
    %949 = vmatpush2.bf16.msra.mxu0 0
    %950 = vmatprep.mubr.bf16.mxu0 0
    %951 = vmatmul.mubr.bf16.gmra.mxu0 %v876
    %v952 = vpop.f32.mrf.mxu0
    %v953 = vadd.f32 0.0, %v952
    %v954 = vpop.f32.mrf.mxu0
    %v955 = vpop.f32.mrf.mxu0
    %v956 = vpop.f32.mrf.mxu0
    %957 = vdwg.mxu0
    %v958 = vadd.f32 %v302, %v912
    %v959 = vxor.u32 %v958, 2147483648
    %v960 = vmul.f32 %v959, 1.442695
    %v961 = vpow.pop %v960
    %v962 = vadd.f32 %v961, 1.0
    %v963 = vrcp.pop %v962
    %v964 = vmul.f32 1.0, %v963
    %v965 = vadd.f32 %v304, %v914
    %v966 = vxor.u32 %v965, 2147483648
    %v967 = vmul.f32 %v966, 1.442695
    %v968 = vpow.pop %v967
    %v969 = vadd.f32 %v968, 1.0
    %v970 = vrcp.pop %v969
    %v971 = vmul.f32 1.0, %v970
    %v972 = vadd.f32 %v953, %v643
    %v973 = vmul.f32 %v964, %v972
    %v974 = vadd.f32 %v374, %v973
    %v975 = vtanh.pop %v974
    %v976 = vsub.f32 1.0, %v971
    %v977 = vmul.f32 %v976, %v975
    %v978 = vmul.f32 %v971, %v875
    %v979 = vadd.f32 %v977, %v978
    %v980 = vpack.c.bf16 %v979, %v979
    %981 = vmatprep.subr.bf16.mxu0 %v747
    %982 = vmatpush1.bf16.msra.mxu0 %v746
    %983 = vmatprep.subr.bf16.mxu0 %v744
    %984 = vmatpush1.bf16.msra.mxu0 %v743
    %985 = vmatprep.subr.bf16.mxu0 %v741
    %986 = vmatpush1.bf16.msra.mxu0 %v740
    %987 = vmatprep.subr.bf16.mxu0 %v738
    %988 = vmatpush1.bf16.msra.mxu0 %v737
    %989 = vmatprep.subr.bf16.mxu0 %v735
    %990 = vmatpush1.bf16.msra.mxu0 %v734
    %991 = vmatprep.subr.bf16.mxu0 %v732
    %992 = vmatpush1.bf16.msra.mxu0 %v731
    %993 = vmatprep.subr.bf16.mxu0 %v729
    %994 = vmatpush1.bf16.msra.mxu0 %v728
    %995 = vmatprep.subr.bf16.mxu0 %v726
    %996 = vmatpush1.bf16.msra.mxu0 %v725
    %997 = vmatprep.subr.bf16.mxu0 0
    %998 = vmatpush2.bf16.msra.mxu0 0
    %999 = vmatprep.subr.bf16.mxu0 0
    %1000 = vmatpush2.bf16.msra.mxu0 0
    %1001 = vmatprep.subr.bf16.mxu0 0
    %1002 = vmatpush2.bf16.msra.mxu0 0
    %1003 = vmatprep.subr.bf16.mxu0 0
    %1004 = vmatpush2.bf16.msra.mxu0 0
    %1005 = vmatprep.subr.bf16.mxu0 0
    %1006 = vmatpush2.bf16.msra.mxu0 0
    %1007 = vmatprep.subr.bf16.mxu0 0
    %1008 = vmatpush2.bf16.msra.mxu0 0
    %1009 = vmatprep.subr.bf16.mxu0 0
    %1010 = vmatpush2.bf16.msra.mxu0 0
    %1011 = vmatprep.subr.bf16.mxu0 0
    %1012 = vmatpush2.bf16.msra.mxu0 0
    %1013 = vmatprep.mubr.bf16.mxu0 0
    %1014 = vmatmul.mubr.bf16.gmra.mxu0 %v980
    %v1015 = vpop.f32.mrf.mxu0
    %v1016 = vadd.f32 0.0, %v1015
    %v1017 = vpop.f32.mrf.mxu0
    %v1018 = vadd.f32 0.0, %v1017
    %v1019 = vpop.f32.mrf.mxu0
    %v1020 = vpop.f32.mrf.mxu0
    %1021 = vdwg.mxu0
    %1022 = vmatprep.subr.bf16.mxu0 0
    %1023 = vmatpush1.bf16.msra.mxu0 %v748
    %1024 = vmatprep.subr.bf16.mxu0 0
    %1025 = vmatpush1.bf16.msra.mxu0 %v745
    %1026 = vmatprep.subr.bf16.mxu0 0
    %1027 = vmatpush1.bf16.msra.mxu0 %v742
    %1028 = vmatprep.subr.bf16.mxu0 0
    %1029 = vmatpush1.bf16.msra.mxu0 %v739
    %1030 = vmatprep.subr.bf16.mxu0 0
    %1031 = vmatpush1.bf16.msra.mxu0 %v736
    %1032 = vmatprep.subr.bf16.mxu0 0
    %1033 = vmatpush1.bf16.msra.mxu0 %v733
    %1034 = vmatprep.subr.bf16.mxu0 0
    %1035 = vmatpush1.bf16.msra.mxu0 %v730
    %1036 = vmatprep.subr.bf16.mxu0 0
    %1037 = vmatpush1.bf16.msra.mxu0 %v727
    %1038 = vmatprep.subr.bf16.mxu0 0
    %1039 = vmatpush2.bf16.msra.mxu0 0
    %1040 = vmatprep.subr.bf16.mxu0 0
    %1041 = vmatpush2.bf16.msra.mxu0 0
    %1042 = vmatprep.subr.bf16.mxu0 0
    %1043 = vmatpush2.bf16.msra.mxu0 0
    %1044 = vmatprep.subr.bf16.mxu0 0
    %1045 = vmatpush2.bf16.msra.mxu0 0
    %1046 = vmatprep.subr.bf16.mxu0 0
    %1047 = vmatpush2.bf16.msra.mxu0 0
    %1048 = vmatprep.subr.bf16.mxu0 0
    %1049 = vmatpush2.bf16.msra.mxu0 0
    %1050 = vmatprep.subr.bf16.mxu0 0
    %1051 = vmatpush2.bf16.msra.mxu0 0
    %1052 = vmatprep.subr.bf16.mxu0 0
    %1053 = vmatpush2.bf16.msra.mxu0 0
    %1054 = vmatprep.mubr.bf16.mxu0 0
    %1055 = vmatmul.mubr.bf16.gmra.mxu0 %v980
    %v1056 = vpop.f32.mrf.mxu0
    %v1057 = vadd.f32 0.0, %v1056
    %v1058 = vpop.f32.mrf.mxu0
    %v1059 = vpop.f32.mrf.mxu0
    %v1060 = vpop.f32.mrf.mxu0
    %1061 = vdwg.mxu0
    %v1062 = vadd.f32 %v308, %v1016
    %v1063 = vxor.u32 %v1062, 2147483648
    %v1064 = vmul.f32 %v1063, 1.442695
    %v1065 = vpow.pop %v1064
    %v1066 = vadd.f32 %v1065, 1.0
    %v1067 = vrcp.pop %v1066
    %v1068 = vmul.f32 1.0, %v1067
    %v1069 = vadd.f32 %v310, %v1018
    %v1070 = vxor.u32 %v1069, 2147483648
    %v1071 = vmul.f32 %v1070, 1.442695
    %v1072 = vpow.pop %v1071
    %v1073 = vadd.f32 %v1072, 1.0
    %v1074 = vrcp.pop %v1073
    %v1075 = vmul.f32 1.0, %v1074
    %v1076 = vadd.f32 %v1057, %v643
    %v1077 = vmul.f32 %v1068, %v1076
    %v1078 = vadd.f32 %v379, %v1077
    %v1079 = vtanh.pop %v1078
    %v1080 = vsub.f32 1.0, %v1075
    %v1081 = vmul.f32 %v1080, %v1079
    %v1082 = vmul.f32 %v1075, %v979
    %v1083 = vadd.f32 %v1081, %v1082
    %v1084 = vpack.c.bf16 %v1083, %v1083
    %1085 = vmatprep.subr.bf16.mxu0 %v747
    %1086 = vmatpush1.bf16.msra.mxu0 %v746
    %1087 = vmatprep.subr.bf16.mxu0 %v744
    %1088 = vmatpush1.bf16.msra.mxu0 %v743
    %1089 = vmatprep.subr.bf16.mxu0 %v741
    %1090 = vmatpush1.bf16.msra.mxu0 %v740
    %1091 = vmatprep.subr.bf16.mxu0 %v738
    %1092 = vmatpush1.bf16.msra.mxu0 %v737
    %1093 = vmatprep.subr.bf16.mxu0 %v735
    %1094 = vmatpush1.bf16.msra.mxu0 %v734
    %1095 = vmatprep.subr.bf16.mxu0 %v732
    %1096 = vmatpush1.bf16.msra.mxu0 %v731
    %1097 = vmatprep.subr.bf16.mxu0 %v729
    %1098 = vmatpush1.bf16.msra.mxu0 %v728
    %1099 = vmatprep.subr.bf16.mxu0 %v726
    %1100 = vmatpush1.bf16.msra.mxu0 %v725
    %1101 = vmatprep.subr.bf16.mxu0 0
    %1102 = vmatpush2.bf16.msra.mxu0 0
    %1103 = vmatprep.subr.bf16.mxu0 0
    %1104 = vmatpush2.bf16.msra.mxu0 0
    %1105 = vmatprep.subr.bf16.mxu0 0
    %1106 = vmatpush2.bf16.msra.mxu0 0
    %1107 = vmatprep.subr.bf16.mxu0 0
    %1108 = vmatpush2.bf16.msra.mxu0 0
    %1109 = vmatprep.subr.bf16.mxu0 0
    %1110 = vmatpush2.bf16.msra.mxu0 0
    %1111 = vmatprep.subr.bf16.mxu0 0
    %1112 = vmatpush2.bf16.msra.mxu0 0
    %1113 = vmatprep.subr.bf16.mxu0 0
    %1114 = vmatpush2.bf16.msra.mxu0 0
    %1115 = vmatprep.subr.bf16.mxu0 0
    %1116 = vmatpush2.bf16.msra.mxu0 0
    %1117 = vmatprep.mubr.bf16.mxu0 0
    %1118 = vmatmul.mubr.bf16.gmra.mxu0 %v1084
    %v1119 = vpop.f32.mrf.mxu0
    %v1120 = vadd.f32 0.0, %v1119
    %v1121 = vpop.f32.mrf.mxu0
    %v1122 = vadd.f32 0.0, %v1121
    %v1123 = vpop.f32.mrf.mxu0
    %v1124 = vpop.f32.mrf.mxu0
    %1125 = vdwg.mxu0
    %1126 = vmatprep.subr.bf16.mxu0 0
    %1127 = vmatpush1.bf16.msra.mxu0 %v748
    %1128 = vmatprep.subr.bf16.mxu0 0
    %1129 = vmatpush1.bf16.msra.mxu0 %v745
    %1130 = vmatprep.subr.bf16.mxu0 0
    %1131 = vmatpush1.bf16.msra.mxu0 %v742
    %1132 = vmatprep.subr.bf16.mxu0 0
    %1133 = vmatpush1.bf16.msra.mxu0 %v739
    %1134 = vmatprep.subr.bf16.mxu0 0
    %1135 = vmatpush1.bf16.msra.mxu0 %v736
    %1136 = vmatprep.subr.bf16.mxu0 0
    %1137 = vmatpush1.bf16.msra.mxu0 %v733
    %1138 = vmatprep.subr.bf16.mxu0 0
    %1139 = vmatpush1.bf16.msra.mxu0 %v730
    %1140 = vmatprep.subr.bf16.mxu0 0
    %1141 = vmatpush1.bf16.msra.mxu0 %v727
    %1142 = vmatprep.subr.bf16.mxu0 0
    %1143 = vmatpush2.bf16.msra.mxu0 0
    %1144 = vmatprep.subr.bf16.mxu0 0
    %1145 = vmatpush2.bf16.msra.mxu0 0
    %1146 = vmatprep.subr.bf16.mxu0 0
    %1147 = vmatpush2.bf16.msra.mxu0 0
    %1148 = vmatprep.subr.bf16.mxu0 0
    %1149 = vmatpush2.bf16.msra.mxu0 0
    %1150 = vmatprep.subr.bf16.mxu0 0
    %1151 = vmatpush2.bf16.msra.mxu0 0
    %1152 = vmatprep.subr.bf16.mxu0 0
    %1153 = vmatpush2.bf16.msra.mxu0 0
    %1154 = vmatprep.subr.bf16.mxu0 0
    %1155 = vmatpush2.bf16.msra.mxu0 0
    %1156 = vmatprep.subr.bf16.mxu0 0
    %1157 = vmatpush2.bf16.msra.mxu0 0
    %1158 = vmatprep.mubr.bf16.mxu0 0
    %1159 = vmatmul.mubr.bf16.gmra.mxu0 %v1084
    %v1160 = vpop.f32.mrf.mxu0
    %v1161 = vadd.f32 0.0, %v1160
    %v1162 = vpop.f32.mrf.mxu0
    %v1163 = vpop.f32.mrf.mxu0
    %v1164 = vpop.f32.mrf.mxu0
    %1165 = vdwg.mxu0
    %v1166 = vadd.f32 %v312, %v1120
    %v1167 = vxor.u32 %v1166, 2147483648
    %v1168 = vmul.f32 %v1167, 1.442695
    %v1169 = vpow.pop %v1168
    %v1170 = vadd.f32 %v1169, 1.0
    %v1171 = vrcp.pop %v1170
    %v1172 = vmul.f32 1.0, %v1171
    %v1173 = vadd.f32 %v314, %v1122
    %v1174 = vxor.u32 %v1173, 2147483648
    %v1175 = vmul.f32 %v1174, 1.442695
    %v1176 = vpow.pop %v1175
    %v1177 = vadd.f32 %v1176, 1.0
    %v1178 = vrcp.pop %v1177
    %v1179 = vmul.f32 1.0, %v1178
    %v1180 = vadd.f32 %v1161, %v643
    %v1181 = vmul.f32 %v1172, %v1180
    %v1182 = vadd.f32 %v382, %v1181
    %v1183 = vtanh.pop %v1182
    %v1184 = vsub.f32 1.0, %v1179
    %v1185 = vmul.f32 %v1184, %v1183
    %v1186 = vmul.f32 %v1179, %v1083
    %v1187 = vadd.f32 %v1185, %v1186
    %v1188 = vpack.c.bf16 %v1187, %v1187
    %1189 = vmatprep.subr.bf16.mxu0 %v747
    %1190 = vmatpush1.bf16.msra.mxu0 %v746
    %1191 = vmatprep.subr.bf16.mxu0 %v744
    %1192 = vmatpush1.bf16.msra.mxu0 %v743
    %1193 = vmatprep.subr.bf16.mxu0 %v741
    %1194 = vmatpush1.bf16.msra.mxu0 %v740
    %1195 = vmatprep.subr.bf16.mxu0 %v738
    %1196 = vmatpush1.bf16.msra.mxu0 %v737
    %1197 = vmatprep.subr.bf16.mxu0 %v735
    %1198 = vmatpush1.bf16.msra.mxu0 %v734
    %1199 = vmatprep.subr.bf16.mxu0 %v732
    %1200 = vmatpush1.bf16.msra.mxu0 %v731
    %1201 = vmatprep.subr.bf16.mxu0 %v729
    %1202 = vmatpush1.bf16.msra.mxu0 %v728
    %1203 = vmatprep.subr.bf16.mxu0 %v726
    %1204 = vmatpush1.bf16.msra.mxu0 %v725
    %1205 = vmatprep.subr.bf16.mxu0 0
    %1206 = vmatpush2.bf16.msra.mxu0 0
    %1207 = vmatprep.subr.bf16.mxu0 0
    %1208 = vmatpush2.bf16.msra.mxu0 0
    %1209 = vmatprep.subr.bf16.mxu0 0
    %1210 = vmatpush2.bf16.msra.mxu0 0
    %1211 = vmatprep.subr.bf16.mxu0 0
    %1212 = vmatpush2.bf16.msra.mxu0 0
    %1213 = vmatprep.subr.bf16.mxu0 0
    %1214 = vmatpush2.bf16.msra.mxu0 0
    %1215 = vmatprep.subr.bf16.mxu0 0
    %1216 = vmatpush2.bf16.msra.mxu0 0
    %1217 = vmatprep.subr.bf16.mxu0 0
    %1218 = vmatpush2.bf16.msra.mxu0 0
    %1219 = vmatprep.subr.bf16.mxu0 0
    %1220 = vmatpush2.bf16.msra.mxu0 0
    %1221 = vmatprep.mubr.bf16.mxu0 0
    %1222 = vmatmul.mubr.bf16.gmra.mxu0 %v1188
    %v1223 = vpop.f32.mrf.mxu0
    %v1224 = vadd.f32 0.0, %v1223
    %v1225 = vpop.f32.mrf.mxu0
    %v1226 = vadd.f32 0.0, %v1225
    %v1227 = vpop.f32.mrf.mxu0
    %v1228 = vpop.f32.mrf.mxu0
    %1229 = vdwg.mxu0
    %1230 = vmatprep.subr.bf16.mxu0 0
    %1231 = vmatpush1.bf16.msra.mxu0 %v748
    %1232 = vmatprep.subr.bf16.mxu0 0
    %1233 = vmatpush1.bf16.msra.mxu0 %v745
    %1234 = vmatprep.subr.bf16.mxu0 0
    %1235 = vmatpush1.bf16.msra.mxu0 %v742
    %1236 = vmatprep.subr.bf16.mxu0 0
    %1237 = vmatpush1.bf16.msra.mxu0 %v739
    %1238 = vmatprep.subr.bf16.mxu0 0
    %1239 = vmatpush1.bf16.msra.mxu0 %v736
    %1240 = vmatprep.subr.bf16.mxu0 0
    %1241 = vmatpush1.bf16.msra.mxu0 %v733
    %1242 = vmatprep.subr.bf16.mxu0 0
    %1243 = vmatpush1.bf16.msra.mxu0 %v730
    %1244 = vmatprep.subr.bf16.mxu0 0
    %1245 = vmatpush1.bf16.msra.mxu0 %v727
    %1246 = vmatprep.subr.bf16.mxu0 0
    %1247 = vmatpush2.bf16.msra.mxu0 0
    %1248 = vmatprep.subr.bf16.mxu0 0
    %1249 = vmatpush2.bf16.msra.mxu0 0
    %1250 = vmatprep.subr.bf16.mxu0 0
    %1251 = vmatpush2.bf16.msra.mxu0 0
    %1252 = vmatprep.subr.bf16.mxu0 0
    %1253 = vmatpush2.bf16.msra.mxu0 0
    %1254 = vmatprep.subr.bf16.mxu0 0
    %1255 = vmatpush2.bf16.msra.mxu0 0
    %1256 = vmatprep.subr.bf16.mxu0 0
    %1257 = vmatpush2.bf16.msra.mxu0 0
    %1258 = vmatprep.subr.bf16.mxu0 0
    %1259 = vmatpush2.bf16.msra.mxu0 0
    %1260 = vmatprep.subr.bf16.mxu0 0
    %1261 = vmatpush2.bf16.msra.mxu0 0
    %1262 = vmatprep.mubr.bf16.mxu0 0
    %1263 = vmatmul.mubr.bf16.gmra.mxu0 %v1188
    %v1264 = vpop.f32.mrf.mxu0
    %v1265 = vadd.f32 0.0, %v1264
    %v1266 = vpop.f32.mrf.mxu0
    %v1267 = vpop.f32.mrf.mxu0
    %v1268 = vpop.f32.mrf.mxu0
    %1269 = vdwg.mxu0
    %v1270 = vadd.f32 %v318, %v1224
    %v1271 = vxor.u32 %v1270, 2147483648
    %v1272 = vmul.f32 %v1271, 1.442695
    %v1273 = vpow.pop %v1272
    %v1274 = vadd.f32 %v1273, 1.0
    %v1275 = vrcp.pop %v1274
    %v1276 = vmul.f32 1.0, %v1275
    %v1277 = vadd.f32 %v320, %v1226
    %v1278 = vxor.u32 %v1277, 2147483648
    %v1279 = vmul.f32 %v1278, 1.442695
    %v1280 = vpow.pop %v1279
    %v1281 = vadd.f32 %v1280, 1.0
    %v1282 = vrcp.pop %v1281
    %v1283 = vmul.f32 1.0, %v1282
    %v1284 = vadd.f32 %v1265, %v643
    %v1285 = vmul.f32 %v1276, %v1284
    %v1286 = vadd.f32 %v387, %v1285
    %v1287 = vtanh.pop %v1286
    %v1288 = vsub.f32 1.0, %v1283
    %v1289 = vmul.f32 %v1288, %v1287
    %v1290 = vmul.f32 %v1283, %v1187
    %v1291 = vadd.f32 %v1289, %v1290
    %v1292 = vpack.c.bf16 %v1291, %v1291
    %1293 = vmatprep.subr.bf16.mxu0 %v747
    %1294 = vmatpush1.bf16.msra.mxu0 %v746
    %1295 = vmatprep.subr.bf16.mxu0 %v744
    %1296 = vmatpush1.bf16.msra.mxu0 %v743
    %1297 = vmatprep.subr.bf16.mxu0 %v741
    %1298 = vmatpush1.bf16.msra.mxu0 %v740
    %1299 = vmatprep.subr.bf16.mxu0 %v738
    %1300 = vmatpush1.bf16.msra.mxu0 %v737
    %1301 = vmatprep.subr.bf16.mxu0 %v735
    %1302 = vmatpush1.bf16.msra.mxu0 %v734
    %1303 = vmatprep.subr.bf16.mxu0 %v732
    %1304 = vmatpush1.bf16.msra.mxu0 %v731
    %1305 = vmatprep.subr.bf16.mxu0 %v729
    %1306 = vmatpush1.bf16.msra.mxu0 %v728
    %1307 = vmatprep.subr.bf16.mxu0 %v726
    %1308 = vmatpush1.bf16.msra.mxu0 %v725
    %1309 = vmatprep.subr.bf16.mxu0 0
    %1310 = vmatpush2.bf16.msra.mxu0 0
    %1311 = vmatprep.subr.bf16.mxu0 0
    %1312 = vmatpush2.bf16.msra.mxu0 0
    %1313 = vmatprep.subr.bf16.mxu0 0
    %1314 = vmatpush2.bf16.msra.mxu0 0
    %1315 = vmatprep.subr.bf16.mxu0 0
    %1316 = vmatpush2.bf16.msra.mxu0 0
    %1317 = vmatprep.subr.bf16.mxu0 0
    %1318 = vmatpush2.bf16.msra.mxu0 0
    %1319 = vmatprep.subr.bf16.mxu0 0
    %1320 = vmatpush2.bf16.msra.mxu0 0
    %1321 = vmatprep.subr.bf16.mxu0 0
    %1322 = vmatpush2.bf16.msra.mxu0 0
    %1323 = vmatprep.subr.bf16.mxu0 0
    %1324 = vmatpush2.bf16.msra.mxu0 0
    %1325 = vmatprep.mubr.bf16.mxu0 0
    %1326 = vmatmul.mubr.bf16.gmra.mxu0 %v1292
    %v1327 = vpop.f32.mrf.mxu0
    %v1328 = vadd.f32 0.0, %v1327
    %v1329 = vpop.f32.mrf.mxu0
    %v1330 = vadd.f32 0.0, %v1329
    %v1331 = vpop.f32.mrf.mxu0
    %v1332 = vpop.f32.mrf.mxu0
    %1333 = vdwg.mxu0
    %1334 = vmatprep.subr.bf16.mxu0 0
    %1335 = vmatpush1.bf16.msra.mxu0 %v748
    %1336 = vmatprep.subr.bf16.mxu0 0
    %1337 = vmatpush1.bf16.msra.mxu0 %v745
    %1338 = vmatprep.subr.bf16.mxu0 0
    %1339 = vmatpush1.bf16.msra.mxu0 %v742
    %1340 = vmatprep.subr.bf16.mxu0 0
    %1341 = vmatpush1.bf16.msra.mxu0 %v739
    %1342 = vmatprep.subr.bf16.mxu0 0
    %1343 = vmatpush1.bf16.msra.mxu0 %v736
    %1344 = vmatprep.subr.bf16.mxu0 0
    %1345 = vmatpush1.bf16.msra.mxu0 %v733
    %1346 = vmatprep.subr.bf16.mxu0 0
    %1347 = vmatpush1.bf16.msra.mxu0 %v730
    %1348 = vmatprep.subr.bf16.mxu0 0
    %1349 = vmatpush1.bf16.msra.mxu0 %v727
    %1350 = vmatprep.subr.bf16.mxu0 0
    %1351 = vmatpush2.bf16.msra.mxu0 0
    %1352 = vmatprep.subr.bf16.mxu0 0
    %1353 = vmatpush2.bf16.msra.mxu0 0
    %1354 = vmatprep.subr.bf16.mxu0 0
    %1355 = vmatpush2.bf16.msra.mxu0 0
    %1356 = vmatprep.subr.bf16.mxu0 0
    %1357 = vmatpush2.bf16.msra.mxu0 0
    %1358 = vmatprep.subr.bf16.mxu0 0
    %1359 = vmatpush2.bf16.msra.mxu0 0
    %1360 = vmatprep.subr.bf16.mxu0 0
    %1361 = vmatpush2.bf16.msra.mxu0 0
    %1362 = vmatprep.subr.bf16.mxu0 0
    %1363 = vmatpush2.bf16.msra.mxu0 0
    %1364 = vmatprep.subr.bf16.mxu0 0
    %1365 = vmatpush2.bf16.msra.mxu0 0
    %1366 = vmatprep.mubr.bf16.mxu0 0
    %1367 = vmatmul.mubr.bf16.gmra.mxu0 %v1292
    %v1368 = vpop.f32.mrf.mxu0
    %v1369 = vadd.f32 0.0, %v1368
    %v1370 = vpop.f32.mrf.mxu0
    %v1371 = vpop.f32.mrf.mxu0
    %v1372 = vpop.f32.mrf.mxu0
    %1373 = vdwg.mxu0
    %v1374 = vadd.f32 %v322, %v1328
    %v1375 = vxor.u32 %v1374, 2147483648
    %v1376 = vmul.f32 %v1375, 1.442695
    %v1377 = vpow.pop %v1376
    %v1378 = vadd.f32 %v1377, 1.0
    %v1379 = vrcp.pop %v1378
    %v1380 = vmul.f32 1.0, %v1379
    %v1381 = vadd.f32 %v324, %v1330
    %v1382 = vxor.u32 %v1381, 2147483648
    %v1383 = vmul.f32 %v1382, 1.442695
    %v1384 = vpow.pop %v1383
    %v1385 = vadd.f32 %v1384, 1.0
    %v1386 = vrcp.pop %v1385
    %v1387 = vmul.f32 1.0, %v1386
    %v1388 = vadd.f32 %v1369, %v643
    %v1389 = vmul.f32 %v1380, %v1388
    %v1390 = vadd.f32 %v390, %v1389
    %v1391 = vtanh.pop %v1390
    %v1392 = vsub.f32 1.0, %v1387
    %v1393 = vmul.f32 %v1392, %v1391
    %v1394 = vmul.f32 %v1387, %v1291
    %v1395 = vadd.f32 %v1393, %v1394
    %v1396 = vpack.c.bf16 %v1395, %v1395
    %1397 = vmatprep.subr.bf16.mxu0 %v747
    %1398 = vmatpush1.bf16.msra.mxu0 %v746
    %1399 = vmatprep.subr.bf16.mxu0 %v744
    %1400 = vmatpush1.bf16.msra.mxu0 %v743
    %1401 = vmatprep.subr.bf16.mxu0 %v741
    %1402 = vmatpush1.bf16.msra.mxu0 %v740
    %1403 = vmatprep.subr.bf16.mxu0 %v738
    %1404 = vmatpush1.bf16.msra.mxu0 %v737
    %1405 = vmatprep.subr.bf16.mxu0 %v735
    %1406 = vmatpush1.bf16.msra.mxu0 %v734
    %1407 = vmatprep.subr.bf16.mxu0 %v732
    %1408 = vmatpush1.bf16.msra.mxu0 %v731
    %1409 = vmatprep.subr.bf16.mxu0 %v729
    %1410 = vmatpush1.bf16.msra.mxu0 %v728
    %1411 = vmatprep.subr.bf16.mxu0 %v726
    %1412 = vmatpush1.bf16.msra.mxu0 %v725
    %1413 = vmatprep.subr.bf16.mxu0 0
    %1414 = vmatpush2.bf16.msra.mxu0 0
    %1415 = vmatprep.subr.bf16.mxu0 0
    %1416 = vmatpush2.bf16.msra.mxu0 0
    %1417 = vmatprep.subr.bf16.mxu0 0
    %1418 = vmatpush2.bf16.msra.mxu0 0
    %1419 = vmatprep.subr.bf16.mxu0 0
    %1420 = vmatpush2.bf16.msra.mxu0 0
    %1421 = vmatprep.subr.bf16.mxu0 0
    %1422 = vmatpush2.bf16.msra.mxu0 0
    %1423 = vmatprep.subr.bf16.mxu0 0
    %1424 = vmatpush2.bf16.msra.mxu0 0
    %1425 = vmatprep.subr.bf16.mxu0 0
    %1426 = vmatpush2.bf16.msra.mxu0 0
    %1427 = vmatprep.subr.bf16.mxu0 0
    %1428 = vmatpush2.bf16.msra.mxu0 0
    %1429 = vmatprep.mubr.bf16.mxu0 0
    %1430 = vmatmul.mubr.bf16.gmra.mxu0 %v1396
    %v1431 = vpop.f32.mrf.mxu0
    %v1432 = vadd.f32 0.0, %v1431
    %v1433 = vpop.f32.mrf.mxu0
    %v1434 = vadd.f32 0.0, %v1433
    %v1435 = vpop.f32.mrf.mxu0
    %v1436 = vpop.f32.mrf.mxu0
    %1437 = vdwg.mxu0
    %1438 = vmatprep.subr.bf16.mxu0 0
    %1439 = vmatpush1.bf16.msra.mxu0 %v748
    %1440 = vmatprep.subr.bf16.mxu0 0
    %1441 = vmatpush1.bf16.msra.mxu0 %v745
    %1442 = vmatprep.subr.bf16.mxu0 0
    %1443 = vmatpush1.bf16.msra.mxu0 %v742
    %1444 = vmatprep.subr.bf16.mxu0 0
    %1445 = vmatpush1.bf16.msra.mxu0 %v739
    %1446 = vmatprep.subr.bf16.mxu0 0
    %1447 = vmatpush1.bf16.msra.mxu0 %v736
    %1448 = vmatprep.subr.bf16.mxu0 0
    %1449 = vmatpush1.bf16.msra.mxu0 %v733
    %1450 = vmatprep.subr.bf16.mxu0 0
    %1451 = vmatpush1.bf16.msra.mxu0 %v730
    %1452 = vmatprep.subr.bf16.mxu0 0
    %1453 = vmatpush1.bf16.msra.mxu0 %v727
    %1454 = vmatprep.subr.bf16.mxu0 0
    %1455 = vmatpush2.bf16.msra.mxu0 0
    %1456 = vmatprep.subr.bf16.mxu0 0
    %1457 = vmatpush2.bf16.msra.mxu0 0
    %1458 = vmatprep.subr.bf16.mxu0 0
    %1459 = vmatpush2.bf16.msra.mxu0 0
    %1460 = vmatprep.subr.bf16.mxu0 0
    %1461 = vmatpush2.bf16.msra.mxu0 0
    %1462 = vmatprep.subr.bf16.mxu0 0
    %1463 = vmatpush2.bf16.msra.mxu0 0
    %1464 = vmatprep.subr.bf16.mxu0 0
    %1465 = vmatpush2.bf16.msra.mxu0 0
    %1466 = vmatprep.subr.bf16.mxu0 0
    %1467 = vmatpush2.bf16.msra.mxu0 0
    %1468 = vmatprep.subr.bf16.mxu0 0
    %1469 = vmatpush2.bf16.msra.mxu0 0
    %1470 = vmatprep.mubr.bf16.mxu0 0
    %1471 = vmatmul.mubr.bf16.gmra.mxu0 %v1396
    %v1472 = vpop.f32.mrf.mxu0
    %v1473 = vadd.f32 0.0, %v1472
    %v1474 = vpop.f32.mrf.mxu0
    %v1475 = vpop.f32.mrf.mxu0
    %v1476 = vpop.f32.mrf.mxu0
    %1477 = vdwg.mxu0
    %v1478 = vadd.f32 %v328, %v1432
    %v1479 = vxor.u32 %v1478, 2147483648
    %v1480 = vmul.f32 %v1479, 1.442695
    %v1481 = vpow.pop %v1480
    %v1482 = vadd.f32 %v1481, 1.0
    %v1483 = vrcp.pop %v1482
    %v1484 = vmul.f32 1.0, %v1483
    %v1485 = vadd.f32 %v330, %v1434
    %v1486 = vxor.u32 %v1485, 2147483648
    %v1487 = vmul.f32 %v1486, 1.442695
    %v1488 = vpow.pop %v1487
    %v1489 = vadd.f32 %v1488, 1.0
    %v1490 = vrcp.pop %v1489
    %v1491 = vmul.f32 1.0, %v1490
    %v1492 = vadd.f32 %v1473, %v643
    %v1493 = vmul.f32 %v1484, %v1492
    %v1494 = vadd.f32 %v395, %v1493
    %v1495 = vtanh.pop %v1494
    %v1496 = vsub.f32 1.0, %v1491
    %v1497 = vmul.f32 %v1496, %v1495
    %v1498 = vmul.f32 %v1491, %v1395
    %v1499 = vadd.f32 %v1497, %v1498
    %v1500 = vpack.c.bf16 %v1499, %v1499
    %1501 = vmatprep.subr.bf16.mxu0 %v747
    %1502 = vmatpush1.bf16.msra.mxu0 %v746
    %1503 = vmatprep.subr.bf16.mxu0 %v744
    %1504 = vmatpush1.bf16.msra.mxu0 %v743
    %1505 = vmatprep.subr.bf16.mxu0 %v741
    %1506 = vmatpush1.bf16.msra.mxu0 %v740
    %1507 = vmatprep.subr.bf16.mxu0 %v738
    %1508 = vmatpush1.bf16.msra.mxu0 %v737
    %1509 = vmatprep.subr.bf16.mxu0 %v735
    %1510 = vmatpush1.bf16.msra.mxu0 %v734
    %1511 = vmatprep.subr.bf16.mxu0 %v732
    %1512 = vmatpush1.bf16.msra.mxu0 %v731
    %1513 = vmatprep.subr.bf16.mxu0 %v729
    %1514 = vmatpush1.bf16.msra.mxu0 %v728
    %1515 = vmatprep.subr.bf16.mxu0 %v726
    %1516 = vmatpush1.bf16.msra.mxu0 %v725
    %1517 = vmatprep.subr.bf16.mxu0 0
    %1518 = vmatpush2.bf16.msra.mxu0 0
    %1519 = vmatprep.subr.bf16.mxu0 0
    %1520 = vmatpush2.bf16.msra.mxu0 0
    %1521 = vmatprep.subr.bf16.mxu0 0
    %1522 = vmatpush2.bf16.msra.mxu0 0
    %1523 = vmatprep.subr.bf16.mxu0 0
    %1524 = vmatpush2.bf16.msra.mxu0 0
    %1525 = vmatprep.subr.bf16.mxu0 0
    %1526 = vmatpush2.bf16.msra.mxu0 0
    %1527 = vmatprep.subr.bf16.mxu0 0
    %1528 = vmatpush2.bf16.msra.mxu0 0
    %1529 = vmatprep.subr.bf16.mxu0 0
    %1530 = vmatpush2.bf16.msra.mxu0 0
    %1531 = vmatprep.subr.bf16.mxu0 0
    %1532 = vmatpush2.bf16.msra.mxu0 0
    %1533 = vmatprep.mubr.bf16.mxu0 0
    %1534 = vmatmul.mubr.bf16.gmra.mxu0 %v1500
    %v1535 = vpop.f32.mrf.mxu0
    %v1536 = vadd.f32 0.0, %v1535
    %v1537 = vpop.f32.mrf.mxu0
    %v1538 = vadd.f32 0.0, %v1537
    %v1539 = vpop.f32.mrf.mxu0
    %v1540 = vpop.f32.mrf.mxu0
    %1541 = vdwg.mxu0
    %1542 = vmatprep.subr.bf16.mxu0 0
    %1543 = vmatpush1.bf16.msra.mxu0 %v748
    %1544 = vmatprep.subr.bf16.mxu0 0
    %1545 = vmatpush1.bf16.msra.mxu0 %v745
    %1546 = vmatprep.subr.bf16.mxu0 0
    %1547 = vmatpush1.bf16.msra.mxu0 %v742
    %1548 = vmatprep.subr.bf16.mxu0 0
    %1549 = vmatpush1.bf16.msra.mxu0 %v739
    %1550 = vmatprep.subr.bf16.mxu0 0
    %1551 = vmatpush1.bf16.msra.mxu0 %v736
    %1552 = vmatprep.subr.bf16.mxu0 0
    %1553 = vmatpush1.bf16.msra.mxu0 %v733
    %1554 = vmatprep.subr.bf16.mxu0 0
    %1555 = vmatpush1.bf16.msra.mxu0 %v730
    %1556 = vmatprep.subr.bf16.mxu0 0
    %1557 = vmatpush1.bf16.msra.mxu0 %v727
    %1558 = vmatprep.subr.bf16.mxu0 0
    %1559 = vmatpush2.bf16.msra.mxu0 0
    %1560 = vmatprep.subr.bf16.mxu0 0
    %1561 = vmatpush2.bf16.msra.mxu0 0
    %1562 = vmatprep.subr.bf16.mxu0 0
    %1563 = vmatpush2.bf16.msra.mxu0 0
    %1564 = vmatprep.subr.bf16.mxu0 0
    %1565 = vmatpush2.bf16.msra.mxu0 0
    %1566 = vmatprep.subr.bf16.mxu0 0
    %1567 = vmatpush2.bf16.msra.mxu0 0
    %1568 = vmatprep.subr.bf16.mxu0 0
    %1569 = vmatpush2.bf16.msra.mxu0 0
    %1570 = vmatprep.subr.bf16.mxu0 0
    %1571 = vmatpush2.bf16.msra.mxu0 0
    %1572 = vmatprep.subr.bf16.mxu0 0
    %1573 = vmatpush2.bf16.msra.mxu0 0
    %1574 = vmatprep.mubr.bf16.mxu0 0
    %1575 = vmatmul.mubr.bf16.gmra.mxu0 %v1500
    %v1576 = vpop.f32.mrf.mxu0
    %v1577 = vadd.f32 0.0, %v1576
    %v1578 = vpop.f32.mrf.mxu0
    %v1579 = vpop.f32.mrf.mxu0
    %v1580 = vpop.f32.mrf.mxu0
    %1581 = vdwg.mxu0
    %v1582 = vadd.f32 %v332, %v1536
    %v1583 = vxor.u32 %v1582, 2147483648
    %v1584 = vmul.f32 %v1583, 1.442695
    %v1585 = vpow.pop %v1584
    %v1586 = vadd.f32 %v1585, 1.0
    %v1587 = vrcp.pop %v1586
    %v1588 = vmul.f32 1.0, %v1587
    %v1589 = vadd.f32 %v334, %v1538
    %v1590 = vxor.u32 %v1589, 2147483648
    %v1591 = vmul.f32 %v1590, 1.442695
    %v1592 = vpow.pop %v1591
    %v1593 = vadd.f32 %v1592, 1.0
    %v1594 = vrcp.pop %v1593
    %v1595 = vmul.f32 1.0, %v1594
    %v1596 = vadd.f32 %v1577, %v643
    %v1597 = vmul.f32 %v1588, %v1596
    %v1598 = vadd.f32 %v398, %v1597
    %v1599 = vtanh.pop %v1598
    %v1600 = vsub.f32 1.0, %v1595
    %v1601 = vmul.f32 %v1600, %v1599
    %v1602 = vmul.f32 %v1595, %v1499
    %v1603 = vadd.f32 %v1601, %v1602
    %v1604 = vpack.c.bf16 %v1603, %v1603
    %v1605 = vld [vmem:[#allocation10] sm:$0xff]
    %v1606 = vld [vmem:[#allocation10 + $0x8] sm:$0xff]
    %v1607 = vld [vmem:[#allocation10 + $0x10] sm:$0xff]
    %v1608 = vld [vmem:[#allocation10 + $0x18] sm:$0xff]
    %v1609 = vld [vmem:[#allocation10 + $0x20] sm:$0xff]
    %v1610 = vld [vmem:[#allocation10 + $0x28] sm:$0xff]
    %v1611 = vld [vmem:[#allocation10 + $0x30] sm:$0xff]
    %v1612 = vld [vmem:[#allocation10 + $0x38] sm:$0xff]
    %v1613 = vld [vmem:[#allocation10 + $0x40] sm:$0xff]
    %v1614 = vld [vmem:[#allocation10 + $0x48] sm:$0xff]
    %v1615 = vld [vmem:[#allocation10 + $0x50] sm:$0xff]
    %v1616 = vld [vmem:[#allocation10 + $0x58] sm:$0xff]
    %v1617 = vld [vmem:[#allocation10 + $0x60] sm:$0xff]
    %v1618 = vld [vmem:[#allocation10 + $0x68] sm:$0xff]
    %v1619 = vld [vmem:[#allocation10 + $0x70] sm:$0xff]
    %v1620 = vld [vmem:[#allocation10 + $0x78] sm:$0xff]
    %v1621 = vpack.c.bf16 %v605, %v605
    %v1622 = vld [vmem:[#allocation11] sm:$0xff]
    %v1623 = vld [vmem:[#allocation11 + $0x8] sm:$0xff]
    %v1624 = vld [vmem:[#allocation11 + $0x10] sm:$0xff]
    %v1625 = vld [vmem:[#allocation11 + $0x18] sm:$0xff]
    %v1626 = vld [vmem:[#allocation11 + $0x20] sm:$0xff]
    %v1627 = vld [vmem:[#allocation11 + $0x28] sm:$0xff]
    %v1628 = vld [vmem:[#allocation11 + $0x30] sm:$0xff]
    %v1629 = vld [vmem:[#allocation11 + $0x38] sm:$0xff]
    %v1630 = vld [vmem:[#allocation11 + $0x40] sm:$0xff]
    %v1631 = vld [vmem:[#allocation11 + $0x48] sm:$0xff]
    %v1632 = vld [vmem:[#allocation11 + $0x50] sm:$0xff]
    %v1633 = vld [vmem:[#allocation11 + $0x58] sm:$0xff]
    %v1634 = vld [vmem:[#allocation11 + $0x60] sm:$0xff]
    %v1635 = vld [vmem:[#allocation11 + $0x68] sm:$0xff]
    %v1636 = vld [vmem:[#allocation11 + $0x70] sm:$0xff]
    %v1637 = vld [vmem:[#allocation11 + $0x78] sm:$0xff]
    %v1654 = vunpack.c.l.b16 %v1622
    %v1655 = vunpack.c.h.b16 %v1622
    %v1656 = vunpack.c.l.b16 %v1623
    %v1657 = vunpack.c.h.b16 %v1623
    %v1658 = vunpack.c.l.b16 %v1624
    %v1659 = vunpack.c.h.b16 %v1624
    %v1660 = vunpack.c.l.b16 %v1625
    %v1661 = vunpack.c.h.b16 %v1625
    %v1662 = vunpack.c.l.b16 %v1626
    %v1663 = vunpack.c.h.b16 %v1626
    %v1664 = vunpack.c.l.b16 %v1627
    %v1665 = vunpack.c.h.b16 %v1627
    %v1666 = vunpack.c.l.b16 %v1628
    %v1667 = vunpack.c.h.b16 %v1628
    %v1668 = vunpack.c.l.b16 %v1629
    %v1669 = vunpack.c.h.b16 %v1629
    %v1670 = vunpack.c.l.b16 %v1630
    %v1671 = vunpack.c.h.b16 %v1630
    %v1672 = vunpack.c.l.b16 %v1631
    %v1673 = vunpack.c.h.b16 %v1631
    %v1674 = vunpack.c.l.b16 %v1632
    %v1675 = vunpack.c.h.b16 %v1632
    %v1676 = vunpack.c.l.b16 %v1633
    %v1677 = vunpack.c.h.b16 %v1633
    %v1678 = vunpack.c.l.b16 %v1634
    %v1679 = vunpack.c.h.b16 %v1634
    %v1680 = vunpack.c.l.b16 %v1635
    %v1681 = vunpack.c.h.b16 %v1635
    %v1682 = vunpack.c.l.b16 %v1636
    %v1683 = vunpack.c.h.b16 %v1636
    %v1684 = vunpack.c.l.b16 %v1637
    %v1685 = vunpack.c.h.b16 %v1637
    %v1686 = vpack.c.b16 %v1656, %v1654
    %v1687 = vpack.c.b16 %v1657, %v1655
    %v1688 = vpack.c.b16 %v1660, %v1658
    %v1689 = vpack.c.b16 %v1661, %v1659
    %v1690 = vpack.c.b16 %v1664, %v1662
    %v1691 = vpack.c.b16 %v1665, %v1663
    %v1692 = vpack.c.b16 %v1668, %v1666
    %v1693 = vpack.c.b16 %v1669, %v1667
    %v1694 = vpack.c.b16 %v1672, %v1670
    %v1695 = vpack.c.b16 %v1673, %v1671
    %v1696 = vpack.c.b16 %v1676, %v1674
    %v1697 = vpack.c.b16 %v1677, %v1675
    %v1698 = vpack.c.b16 %v1680, %v1678
    %v1699 = vpack.c.b16 %v1681, %v1679
    %v1700 = vpack.c.b16 %v1684, %v1682
    %v1701 = vpack.c.b16 %v1685, %v1683
    %1718 = vmatprep.subr.bf16.mxu0 %v1701
    %1719 = vmatpush1.bf16.msra.mxu0 %v1700
    %1720 = vmatprep.subr.bf16.mxu0 %v1699
    %1721 = vmatpush1.bf16.msra.mxu0 %v1698
    %1722 = vmatprep.subr.bf16.mxu0 %v1697
    %1723 = vmatpush1.bf16.msra.mxu0 %v1696
    %1724 = vmatprep.subr.bf16.mxu0 %v1695
    %1725 = vmatpush1.bf16.msra.mxu0 %v1694
    %1726 = vmatprep.subr.bf16.mxu0 %v1693
    %1727 = vmatpush1.bf16.msra.mxu0 %v1692
    %1728 = vmatprep.subr.bf16.mxu0 %v1691
    %1729 = vmatpush1.bf16.msra.mxu0 %v1690
    %1730 = vmatprep.subr.bf16.mxu0 %v1689
    %1731 = vmatpush1.bf16.msra.mxu0 %v1688
    %1732 = vmatprep.subr.bf16.mxu0 %v1687
    %1733 = vmatpush1.bf16.msra.mxu0 %v1686
    %1734 = vmatprep.subr.bf16.mxu0 0
    %1735 = vmatpush2.bf16.msra.mxu0 0
    %1736 = vmatprep.subr.bf16.mxu0 0
    %1737 = vmatpush2.bf16.msra.mxu0 0
    %1738 = vmatprep.subr.bf16.mxu0 0
    %1739 = vmatpush2.bf16.msra.mxu0 0
    %1740 = vmatprep.subr.bf16.mxu0 0
    %1741 = vmatpush2.bf16.msra.mxu0 0
    %1742 = vmatprep.subr.bf16.mxu0 0
    %1743 = vmatpush2.bf16.msra.mxu0 0
    %1744 = vmatprep.subr.bf16.mxu0 0
    %1745 = vmatpush2.bf16.msra.mxu0 0
    %1746 = vmatprep.subr.bf16.mxu0 0
    %1747 = vmatpush2.bf16.msra.mxu0 0
    %1748 = vmatprep.subr.bf16.mxu0 0
    %1749 = vmatpush2.bf16.msra.mxu0 0
    %1750 = vmatprep.mubr.bf16.mxu0 0
    %1751 = vmatmul.mubr.bf16.gmra.mxu0 %v1621
    %v1752 = vpop.f32.mrf.mxu0
    %v1753 = vadd.f32 0.0, %v1752
    %v1754 = vpop.f32.mrf.mxu0
    %v1755 = vadd.f32 0.0, %v1754
    %v1756 = vpop.f32.mrf.mxu0
    %v1757 = vpop.f32.mrf.mxu0
    %1758 = vdwg.mxu0
    %v1775 = vunpack.c.l.b16 %v1605
    %v1776 = vunpack.c.h.b16 %v1605
    %v1777 = vunpack.c.l.b16 %v1606
    %v1778 = vunpack.c.h.b16 %v1606
    %v1779 = vunpack.c.l.b16 %v1607
    %v1780 = vunpack.c.h.b16 %v1607
    %v1781 = vunpack.c.l.b16 %v1608
    %v1782 = vunpack.c.h.b16 %v1608
    %v1783 = vunpack.c.l.b16 %v1609
    %v1784 = vunpack.c.h.b16 %v1609
    %v1785 = vunpack.c.l.b16 %v1610
    %v1786 = vunpack.c.h.b16 %v1610
    %v1787 = vunpack.c.l.b16 %v1611
    %v1788 = vunpack.c.h.b16 %v1611
    %v1789 = vunpack.c.l.b16 %v1612
    %v1790 = vunpack.c.h.b16 %v1612
    %v1791 = vunpack.c.l.b16 %v1613
    %v1792 = vunpack.c.h.b16 %v1613
    %v1793 = vunpack.c.l.b16 %v1614
    %v1794 = vunpack.c.h.b16 %v1614
    %v1795 = vunpack.c.l.b16 %v1615
    %v1796 = vunpack.c.h.b16 %v1615
    %v1797 = vunpack.c.l.b16 %v1616
    %v1798 = vunpack.c.h.b16 %v1616
    %v1799 = vunpack.c.l.b16 %v1617
    %v1800 = vunpack.c.h.b16 %v1617
    %v1801 = vunpack.c.l.b16 %v1618
    %v1802 = vunpack.c.h.b16 %v1618
    %v1803 = vunpack.c.l.b16 %v1619
    %v1804 = vunpack.c.h.b16 %v1619
    %v1805 = vunpack.c.l.b16 %v1620
    %v1806 = vunpack.c.h.b16 %v1620
    %v1807 = vpack.c.b16 %v1777, %v1775
    %v1808 = vpack.c.b16 %v1778, %v1776
    %v1809 = vpack.c.b16 %v1781, %v1779
    %v1810 = vpack.c.b16 %v1782, %v1780
    %v1811 = vpack.c.b16 %v1785, %v1783
    %v1812 = vpack.c.b16 %v1786, %v1784
    %v1813 = vpack.c.b16 %v1789, %v1787
    %v1814 = vpack.c.b16 %v1790, %v1788
    %v1815 = vpack.c.b16 %v1793, %v1791
    %v1816 = vpack.c.b16 %v1794, %v1792
    %v1817 = vpack.c.b16 %v1797, %v1795
    %v1818 = vpack.c.b16 %v1798, %v1796
    %v1819 = vpack.c.b16 %v1801, %v1799
    %v1820 = vpack.c.b16 %v1802, %v1800
    %v1821 = vpack.c.b16 %v1805, %v1803
    %v1822 = vpack.c.b16 %v1806, %v1804
    %1839 = vmatprep.subr.bf16.mxu0 %v1822
    %1840 = vmatpush1.bf16.msra.mxu0 %v1821
    %1841 = vmatprep.subr.bf16.mxu0 %v1820
    %1842 = vmatpush1.bf16.msra.mxu0 %v1819
    %1843 = vmatprep.subr.bf16.mxu0 %v1818
    %1844 = vmatpush1.bf16.msra.mxu0 %v1817
    %1845 = vmatprep.subr.bf16.mxu0 %v1816
    %1846 = vmatpush1.bf16.msra.mxu0 %v1815
    %1847 = vmatprep.subr.bf16.mxu0 %v1814
    %1848 = vmatpush1.bf16.msra.mxu0 %v1813
    %1849 = vmatprep.subr.bf16.mxu0 %v1812
    %1850 = vmatpush1.bf16.msra.mxu0 %v1811
    %1851 = vmatprep.subr.bf16.mxu0 %v1810
    %1852 = vmatpush1.bf16.msra.mxu0 %v1809
    %1853 = vmatprep.subr.bf16.mxu0 %v1808
    %1854 = vmatpush1.bf16.msra.mxu0 %v1807
    %1855 = vmatprep.subr.bf16.mxu0 0
    %1856 = vmatpush2.bf16.msra.mxu0 0
    %1857 = vmatprep.subr.bf16.mxu0 0
    %1858 = vmatpush2.bf16.msra.mxu0 0
    %1859 = vmatprep.subr.bf16.mxu0 0
    %1860 = vmatpush2.bf16.msra.mxu0 0
    %1861 = vmatprep.subr.bf16.mxu0 0
    %1862 = vmatpush2.bf16.msra.mxu0 0
    %1863 = vmatprep.subr.bf16.mxu0 0
    %1864 = vmatpush2.bf16.msra.mxu0 0
    %1865 = vmatprep.subr.bf16.mxu0 0
    %1866 = vmatpush2.bf16.msra.mxu0 0
    %1867 = vmatprep.subr.bf16.mxu0 0
    %1868 = vmatpush2.bf16.msra.mxu0 0
    %1869 = vmatprep.subr.bf16.mxu0 0
    %1870 = vmatpush2.bf16.msra.mxu0 0
    %1871 = vmatprep.mubr.bf16.mxu0 0
    %1872 = vmatmul.mubr.bf16.gmra.mxu0 %v1604
    %v1873 = vpop.f32.mrf.mxu0
    %v1874 = vadd.f32 %v1753, %v1873
    %v1875 = vpop.f32.mrf.mxu0
    %v1876 = vadd.f32 %v1755, %v1875
    %v1877 = vpop.f32.mrf.mxu0
    %v1878 = vpop.f32.mrf.mxu0
    %1879 = vdwg.mxu0
    %v1880 = vld [vmem:[%s10] sm:$0x3]
    %v1882 = vlaneseq
    %v1883 = vshrl.u32 %v1882, 7
    %v1884 = vsub.s32 0, %v1883
    %v1885 = vrot.slane %v1880, %v1884
    %v1886 = vlaneseq
    %v1887 = vshrl.u32 %v1886, 7
    %v1888 = vsub.s32 1, %v1887
    %v1889 = vrot.slane %v1880, %v1888
    %v1892 = vadd.f32 %v1874, %v1885
    %v1893 = vadd.f32 %v1876, %v1889
    %v1894 = vand.u32 2147483647, %v1892
    %vm1895 = vcmask 39936
    %1896 = vst.msk [vmem:[#allocation13] sm:$0xff] %vm1895, %v1894
    %v1897 = vxor.u32 %v1893, 2147483648
    %v1898 = vmul.f32 %v1897, 1.442695
    %v1899 = vpow.pop %v1898
    %v1900 = vadd.f32 %v1899, 1.0
    %v1901 = vrcp.pop %v1900
    %v1902 = vmul.f32 1.0, %v1901
    %1903 = vst.msk [vmem:[#allocation14] sm:$0xff] %vm1895, %v1902
    // Predicated region
    $region70: #{tpu_custom_call.1} parent=1 // pred_check
      _
    $region71: #{tpu_custom_call.1} parent=1 // pred_check_branch
      %1905 = sbr.rel (0) target = $region73
    $region72: #{tpu_custom_call.1} parent=1 // pred_region
      %s1907 = ssub.s32 128, 128
      %1908 = vsyncadd [#allocation4], %s1907
      %s1910 = sshll.u32 [#allocation13], 4
      %s1911 = int_to_ptr.vmem [resolvable:$true] %s1910
      %1913 = dma.vmem_to_hbm [thread:$0]  %s1911, 128, %s11, [#allocation4]
    $region73: #{tpu_custom_call.1} parent=1 // pred_fallthru
      _
    // Predicated region
    $region74: #{tpu_custom_call.1} parent=1 // pred_check
      _
    $region75: #{tpu_custom_call.1} parent=1 // pred_check_branch
      %1915 = sbr.rel (0) target = $region77
    $region76: #{tpu_custom_call.1} parent=1 // pred_region
      %s1917 = ssub.s32 128, 128
      %1918 = vsyncadd [#allocation15], %s1917
      %s1920 = sshll.u32 [#allocation14], 4
      %s1921 = int_to_ptr.vmem [resolvable:$true] %s1920
      %1923 = dma.vmem_to_hbm [thread:$0]  %s1921, 128, %s12, [#allocation15]
    $region77: #{tpu_custom_call.1} parent=1 // pred_fallthru
      _
    // Predicated region
    $region78: #{tpu_custom_call.1} parent=1 // pred_check
      _
    $region79: #{tpu_custom_call.1} parent=1 // pred_check_branch
      %1925 = sbr.rel (0) target = $region81
    $region80: #{tpu_custom_call.1} parent=1 // pred_region
      %1926 = dma.done [#allocation4], 128
    $region81: #{tpu_custom_call.1} parent=1 // pred_fallthru
      _
    // Predicated region
    $region82: #{tpu_custom_call.1} parent=1 // pred_check
      _
    $region83: #{tpu_custom_call.1} parent=1 // pred_check_branch
      %1928 = sbr.rel (0) target = $region85
    $region84: #{tpu_custom_call.1} parent=1 // pred_region
      %1929 = dma.done [#allocation15], 128
    $region85: #{tpu_custom_call.1} parent=1 // pred_fallthru
      _
    %1930 = vsyncpa [#allocation3], 1
    %1931 = vsyncpa [#allocation6], 1
    %1932 = vsyncpa [#allocation9], 1
    %1933 = vsyncpa [#allocation12], 1
    %1934 = vsyncpa [#allocation4], 1
    %1935 = vsyncpa [#allocation15], 1

</llo_original>
